<compile_context>
chip_gen: v6e
topology: v6e:2x2x1
jax: 0.10.0
libtpu: 0.0.40
codegen_flags: <defaults>
</compile_context>

<pallas_src>
import functools
import math

import jax
import jax.numpy as jnp
import numpy as np
from jax import lax
from jax.experimental import pallas as pl
from jax.experimental.pallas import tpu as pltpu


# ------------------------------ in-kernel helpers -----------------------------

def _seg_fold(v, op, nch, npos):
    """v: (rows, nch*npos) with position-major lanes (lane = p*nch + ch).

    Tree-folds over positions with wide slices + elementwise ops only; returns
    (rows, nch) = per-channel reduction.  `op` must tolerate duplicated elements
    in the non-power-of-two peel step (max/min do)."""
    m = 1
    while m * 2 <= npos:
        m *= 2
    if m != npos:                                   # peel the tail onto the head
        v = op(v[:, :m * nch], v[:, (npos - m) * nch:])
    while m > 1:
        m //= 2
        v = op(v[:, :m * nch], v[:, m * nch:])
    return v


# ------------------------------ the fused kernel ------------------------------

def _fused_kernel(xs_ref, cols_ref, wbig_ref, bconv_ref, ssel_ref, wfc_ref, bfc_ref,
                  o_ref, *, np2, np3, nch2, nch3, l1):
    """One grid step = (row tile, one input channel cc).

    xs_ref   : (tr, l1)          raw patch pixels (stage 1), f32
    cols_ref : (tr, K)           fused tap-major im2col [stage-3 | stage-2], bf16
    wbig_ref : (K, NY)           fused conv weight: [y3 vals | y2 vals | means | a*sums], bf16
    bconv_ref: (1, NY)           matching bias row, f32
    ssel_ref : (A+B, NC)         selector so yy @ ssel = sum(y^2)/(n-1) per channel, f32
    wfc_ref  : (c, 84, NO)       FC weight, rows permuted to the kernel's feature order
    bfc_ref  : (1, NO)           FC bias (NO = 128-padded for lane-dense stores)
    o_ref    : (tr, NO)          FC output, accumulated over the channel grid axis
    """
    cc = pl.program_id(1)                           # input-channel index (FC reduction)
    A, B = nch3 * np3, nch2 * np2
    NC = nch3 + nch2

    # ---- one fused MXU matmul: conv values + per-channel means + scaled sums ----
    co = (jnp.dot(cols_ref[...], wbig_ref[...], preferred_element_type=jnp.float32)
          + bconv_ref[...])                          # (tr, A + B + 2*NC)

    yv = co[:, :A + B]                               # conv values, position-major lanes
    means = co[:, A + B:A + B + NC]                  # [mean3_0..15, mean2_0..3]
    ssc = co[:, A + B + NC:A + B + 2 * NC]           # alpha * per-channel sums

    # unbiased variance = sum(y^2)/(n-1) - (alpha*sum(y))^2 ; sums are off the MXU
    vpart = jnp.dot(yv * yv, ssel_ref[...], preferred_element_type=jnp.float32)
    vars_ = vpart - ssc * ssc                        # (tr, NC) = [var3..., var2...]

    # per-channel max/min: segmented fold-reduce on full-width data (no narrow slices)
    y3 = yv[:, :A]
    y2 = yv[:, A:A + B]
    max3 = _seg_fold(y3, jnp.maximum, nch3, np3)
    min3 = _seg_fold(y3, jnp.minimum, nch3, np3)
    max2 = _seg_fold(y2, jnp.maximum, nch2, np2)
    min2 = _seg_fold(y2, jnp.minimum, nch2, np2)

    # stage-1 (raw pixels, single spp channel): plain full-lane reductions in f32
    xsv = xs_ref[...]
    mx1 = jnp.max(xsv, axis=-1, keepdims=True)
    mn1 = jnp.min(xsv, axis=-1, keepdims=True)
    m1 = jnp.sum(xsv, axis=-1, keepdims=True) * (1.0 / l1)
    v1 = jnp.sum((xsv - m1) ** 2, axis=-1, keepdims=True) * (1.0 / (l1 - 1))

    # assemble the 84 features as a value; FC weight rows were host-permuted to this order
    feats = jnp.concatenate(
        [max3, min3, max2, min2, means, vars_, mx1, mn1, m1, v1], axis=-1)   # (tr, 84)

    contrib = jnp.dot(feats, wfc_ref[cc], preferred_element_type=jnp.float32)

    @pl.when(cc == 0)
    def _():
        o_ref[...] = bfc_ref[...] + contrib

    @pl.when(cc > 0)
    def _():
        o_ref[...] = o_ref[...] + contrib


# ------------------------------ host-side glue --------------------------------

def _row_tile(r, max_tile=1024):
    """Largest divisor of r that is a multiple of 16 (bf16 sublane packing) and <= max_tile,
    preferring >= 2 row steps so the 'parallel' grid axis spans both v7x TensorCores.
    Falls back to multiples of 8, then to the full extent."""
    cap = min(max_tile, r)
    cands = [t for t in range(16, cap + 1, 16) if r % t == 0]
    if not cands:
        cands = [t for t in range(8, cap + 1, 8) if r % t == 0]
    if not cands:
        return r
    two = [t for t in cands if r // t >= 2]
    return max(two) if two else max(cands)


def _im2col_tapmajor(xc, k, s):
    """xc: (C, R, H, W) -> (C, R, k*k*oh*ow) with lane index = tap*(oh*ow) + pos."""
    c, r, hh, ww = xc.shape
    oh = (hh - k) // s + 1
    ow = (ww - k) // s + 1
    taps = []
    for ki in range(k):
        for kj in range(k):
            taps.append(
                xc[:, :, ki:ki + s * (oh - 1) + 1:s, kj:kj + s * (ow - 1) + 1:s]
                .reshape(c, r, oh * ow))
    cols = jnp.stack(taps, axis=2).reshape(c, r, k * k * oh * ow)
    return cols, oh * ow


def _conv_blocks(w, bias, npos):
    """Conv weight (k*k, nch) -> MXU column blocks (position-major conv output).

    With tap-major im2col cols[row, t*npos + p]:
      (cols @ sval)[row, p*nch + ch] + bval[p*nch + ch] == conv value y[p, ch]
      (cols @ smean)[row, ch]        + bmean[ch]        == mean_p y[p, ch]
      (cols @ ssum)[row, ch]         + bsum[ch]         == alpha * sum_p y[p, ch],
        alpha = 1/sqrt(npos*(npos-1)) so (.)**2 is the unbiased-variance mean^2 term.
    """
    kk, nch = w.shape
    w = w.astype(jnp.float32)
    bias = bias.astype(jnp.float32)
    eye = jnp.eye(npos, dtype=jnp.float32)
    sval = jnp.einsum("tc,pq->tpqc", w, eye).reshape(kk * npos, npos * nch)
    rep = jnp.broadcast_to(w[:, None, :], (kk, npos, nch)).reshape(kk * npos, nch)
    smean = rep * (1.0 / npos)
    alpha = 1.0 / math.sqrt(npos * (npos - 1.0))
    ssum = rep * alpha
    bval = jnp.tile(bias, npos)                 # lane p*nch + ch -> bias[ch]
    bmean = bias
    bsum = bias * (npos * alpha)
    return sval, smean, ssum, bval, bmean, bsum


def _feature_order(nch2, nch3):
    """Torch-local feature indices (within one input channel's 84 features) listed in the
    order the kernel concatenates them: [max3, min3, max2, min2, mean3+2, var3+2, st1 x4]."""
    MAX, MIN, MEAN, VAR = 0, 1, 2, 3
    s2 = lambda ch: 1 + ch                       # torch spp-channel index, stage 2
    s3 = lambda ch: 1 + nch2 + ch                # torch spp-channel index, stage 3
    order = []
    order += [s3(ch) * 4 + MAX for ch in range(nch3)]
    order += [s3(ch) * 4 + MIN for ch in range(nch3)]
    order += [s2(ch) * 4 + MAX for ch in range(nch2)]
    order += [s2(ch) * 4 + MIN for ch in range(nch2)]
    order += [s3(ch) * 4 + MEAN for ch in range(nch3)]
    order += [s2(ch) * 4 + MEAN for ch in range(nch2)]
    order += [s3(ch) * 4 + VAR for ch in range(nch3)]
    order += [s2(ch) * 4 + VAR for ch in range(nch2)]
    order += [MAX, MIN, MEAN, VAR]               # stage 1 (spp channel 0)
    return np.asarray(order, dtype=np.int32)


def init_params(key, input_dim, output_dim=64):
    ks = jax.random.split(key, 6)
    return {
        # stage2_conv: Conv2d(1, 4, k=7, s=3) stored as (k*k, out_ch)
        "w2": jax.random.normal(ks[0], (49, 4), jnp.float32) * 0.1,
        "b2": jax.random.normal(ks[1], (4,), jnp.float32) * 0.1,
        # stage3_conv: Conv2d(1, 16, k=3, s=2)
        "w3": jax.random.normal(ks[2], (9, 16), jnp.float32) * 0.1,
        "b3": jax.random.normal(ks[3], (16,), jnp.float32) * 0.1,
        # fclayer: Linear(84*input_dim, output_dim), stored as (in, out)
        "w_fc": jax.random.normal(ks[4], (84 * input_dim, output_dim), jnp.float32) * 0.05,
        "b_fc": jax.random.normal(ks[5], (output_dim,), jnp.float32) * 0.05,
    }


def cspp_sid_forward(x, params, patch_size=8, max_row_tile=1024):
    b, c, h, w = x.shape
    P = patch_size
    assert h % P == 0 and w % P == 0, "image size must be divisible by patch_size"
    n_h, n_w = h // P, w // P
    assert n_h >= 7 and n_w >= 7, "7x7 stride-3 conv needs per-patch grid >= 7"
    R = b * P * P

    # patchify exactly like the torch code, channel axis in front (FC reduction axis):
    # (b,c,h,w) -> (b,c,P,Nh,P,Nw) -> (b,c,P,P,Nh,Nw) -> (b,c,P*P,Nh,Nw) -> (c, b*P*P, Nh, Nw)
    xp = x.reshape(b, c, P, n_h, P, n_w).transpose(0, 1, 2, 4, 3, 5)
    xp = xp.reshape(b, c, P * P, n_h, n_w)
    xc = xp.transpose(1, 0, 2, 3, 4).reshape(c, R, n_h, n_w).astype(jnp.float32)

    L1 = n_h * n_w
    xs = xc.reshape(c, R, L1)

    cols3, np3 = _im2col_tapmajor(xc, 3, 2)            # stage-3 taps first
    cols2, np2 = _im2col_tapmajor(xc, 7, 3)
    # unbiased variance divides by (n-1): guard the degenerate single-position case
    assert np2 >= 2 and np3 >= 2 and L1 >= 2, \
        "unbiased variance needs >= 2 spatial positions per SPP stage"
    cols = jnp.concatenate([cols3, cols2], axis=2).astype(jnp.bfloat16)

    nch2 = params["w2"].shape[1]                       # 4
    nch3 = params["w3"].shape[1]                       # 16
    NC = nch3 + nch2
    A, B = nch3 * np3, nch2 * np2

    sval3, smean3, ssum3, bval3, bmean3, bsum3 = _conv_blocks(params["w3"], params["b3"], np3)
    sval2, smean2, ssum2, bval2, bmean2, bsum2 = _conv_blocks(params["w2"], params["b2"], np2)
    K3, K2 = sval3.shape[0], sval2.shape[0]

    z = lambda r_, c_: jnp.zeros((r_, c_), jnp.float32)
    wbig = jnp.concatenate([
        jnp.concatenate([sval3, z(K3, B), smean3, z(K3, nch2), ssum3, z(K3, nch2)], axis=1),
        jnp.concatenate([z(K2, A), sval2, z(K2, nch3), smean2, z(K2, nch3), ssum2], axis=1),
    ], axis=0).astype(jnp.bfloat16)                    # (K, A + B + 2*NC)
    bconv = jnp.concatenate([bval3, bval2, bmean3, bmean2, bsum3, bsum2])[None, :]

    # selector so that (y*y) @ ssel gives per-channel sum(y^2)/(n-1)
    ssel = jnp.concatenate([
        jnp.concatenate([jnp.tile(jnp.eye(nch3, dtype=jnp.float32), (np3, 1)) / (np3 - 1),
                         z(A, nch2)], axis=1),
        jnp.concatenate([z(B, nch3),
                         jnp.tile(jnp.eye(nch2, dtype=jnp.float32), (np2, 1)) / (np2 - 1)],
                        axis=1),
    ], axis=0)                                         # (A + B, NC)

    # FC weight: permute the 84 per-channel rows to the kernel's feature order, pad lanes
    nf = 4 * (1 + nch2 + nch3)                         # 84
    out_dim = params["w_fc"].shape[1]
    no = out_dim + (-out_dim % 128)
    order = _feature_order(nch2, nch3)
    wfc = params["w_fc"].astype(jnp.float32).reshape(c, nf, out_dim)[:, order, :]
    wfc = jnp.pad(wfc, ((0, 0), (0, 0), (0, no - out_dim)))
    bfc = jnp.pad(params["b_fc"].astype(jnp.float32), (0, no - out_dim)).reshape(1, no)

    K = cols.shape[2]
    NY = wbig.shape[1]

    tr = _row_tile(R, max_row_tile)
    kernel = functools.partial(_fused_kernel, np2=np2, np3=np3,
                               nch2=nch2, nch3=nch3, l1=L1)

    out = pl.pallas_call(
        kernel,
        out_shape=jax.ShapeDtypeStruct((R, no), jnp.float32),
        grid=(R // tr, c),
        in_specs=[
            pl.BlockSpec((None, tr, L1), lambda i, cc: (cc, i, 0)),    # xs (f32)
            pl.BlockSpec((None, tr, K), lambda i, cc: (cc, i, 0)),     # im2col cols (bf16)
            pl.BlockSpec((K, NY), lambda i, cc: (0, 0)),               # fused conv weight
            pl.BlockSpec((1, NY), lambda i, cc: (0, 0)),               # fused conv bias row
            pl.BlockSpec((A + B, NC), lambda i, cc: (0, 0)),           # sumsq selector
            pl.BlockSpec((c, nf, no), lambda i, cc: (0, 0, 0)),        # FC weight (resident)
            pl.BlockSpec((1, no), lambda i, cc: (0, 0)),               # FC bias
        ],
        out_specs=pl.BlockSpec((tr, no), lambda i, cc: (i, 0)),
        compiler_params=pltpu.CompilerParams(
            dimension_semantics=("parallel", "arbitrary")),
    )(xs, cols, wbig, bconv, ssel, wfc, bfc)

    return out[:, :out_dim].reshape(b, P * P, out_dim)


# ------------------------- pure-JAX reference (check) -------------------------

def _stats_ref(x):
    return jnp.stack([x.max(-1), x.min(-1), x.mean(-1), x.var(-1, ddof=1)], axis=-1)


def reference_forward(x, params, patch_size=8):
    b, c, h, w = x.shape
    P = patch_size
    n_h, n_w = h // P, w // P
    xp = x.reshape(b, c, P, n_h, P, n_w).transpose(0, 1, 2, 4, 3, 5)
    xp = xp.reshape(b, c, P * P, n_h, n_w)
    m = b * c * P * P
    xs = xp.reshape(m, 1, n_h, n_w).astype(jnp.float32)

    st1 = _stats_ref(xs.reshape(b, c, P * P, 1, -1))

    w2 = params["w2"].T.reshape(4, 1, 7, 7)
    y2 = lax.conv_general_dilated(xs, w2, (3, 3), "VALID",
                                  dimension_numbers=("NCHW", "OIHW", "NCHW"))
    y2 = y2 + params["b2"].reshape(1, 4, 1, 1)
    st2 = _stats_ref(y2.reshape(b, c, P * P, 4, -1))

    w3 = params["w3"].T.reshape(16, 1, 3, 3)
    y3 = lax.conv_general_dilated(xs, w3, (2, 2), "VALID",
                                  dimension_numbers=("NCHW", "OIHW", "NCHW"))
    y3 = y3 + params["b3"].reshape(1, 16, 1, 1)
    st3 = _stats_ref(y3.reshape(b, c, P * P, 16, -1))

    feats = jnp.concatenate([st1, st2, st3], axis=3)
    feats = feats.transpose(0, 2, 1, 3, 4).reshape(b, P * P, -1)
    return feats @ params["w_fc"] + params["b_fc"]


# ----------------------------------- main --------------------------------------

if __name__ == "__main__":
    # patch_size=8 needs a per-patch grid >= 10 so every SPP stage has >= 2 positions
    # (7x7/s3 and 3x3/s2 valid convs), hence 80x80 inputs.  c == input_dim of the Linear.
    b, c, h, w = 2, 4, 80, 80
    patch_size = 8

    x = jax.random.normal(jax.random.PRNGKey(0), (b, c, h, w), jnp.float32)
    params = init_params(jax.random.PRNGKey(1), input_dim=c, output_dim=64)

    fwd = jax.jit(functools.partial(cspp_sid_forward, patch_size=patch_size))
    out = jax.block_until_ready(fwd(x, params))
    assert out.shape == (b, patch_size * patch_size, 64)

    ref = reference_forward(x, params, patch_size=patch_size)
    np.testing.assert_allclose(np.asarray(out), np.asarray(ref), rtol=1e-2, atol=1e-2)

    print("KERNEL_OK")
</pallas_src>

<mosaic_0001>
module attributes {stable_mosaic.version = 11 : i64} {
  func.func @_fused_kernel(%arg0: i32, %arg1: i32, %arg2: memref<1x64x100xf32, #tpu.memory_space<vmem>>, %arg3: memref<1x64x340xbf16, #tpu.memory_space<vmem>>, %arg4: memref<340x312xbf16, #tpu.memory_space<vmem>>, %arg5: memref<1x312xf32, #tpu.memory_space<vmem>>, %arg6: memref<272x20xf32, #tpu.memory_space<vmem>>, %arg7: memref<4x84x128xf32, #tpu.memory_space<vmem>>, %arg8: memref<1x128xf32, #tpu.memory_space<vmem>>, %arg9: memref<64x128xf32, #tpu.memory_space<vmem>>) attributes {dimension_semantics = [#tpu.dimension_semantics<parallel>, #tpu.dimension_semantics<arbitrary>], iteration_bounds = array<i64: 2, 4>, scalar_prefetch = 0 : i64, scratch_operands = 0 : i64, tpu.core_type = #tpu.core_type<tc>, window_params = [{transform_indices = @transform_0, window_bounds = array<i64: 1, 64, 100>}, {transform_indices = @transform_1, window_bounds = array<i64: 1, 64, 340>}, {pipeline_mode = #tpu.pipeline_mode<synchronous>, transform_indices = @transform_2, window_bounds = array<i64: 340, 312>}, {pipeline_mode = #tpu.pipeline_mode<synchronous>, transform_indices = @transform_3, window_bounds = array<i64: 1, 312>}, {pipeline_mode = #tpu.pipeline_mode<synchronous>, transform_indices = @transform_4, window_bounds = array<i64: 272, 20>}, {pipeline_mode = #tpu.pipeline_mode<synchronous>, transform_indices = @transform_5, window_bounds = array<i64: 4, 84, 128>}, {pipeline_mode = #tpu.pipeline_mode<synchronous>, transform_indices = @transform_6, window_bounds = array<i64: 1, 128>}, {transform_indices = @transform_7, window_bounds = array<i64: 64, 128>}]} {
    %c0 = arith.constant 0 : index
    %c0_0 = arith.constant 0 : index
    %c0_1 = arith.constant 0 : index
    %0 = vector.load %arg3[%c0, %c0_0, %c0_1] : memref<1x64x340xbf16, #tpu.memory_space<vmem>>, vector<1x64x340xbf16>
    %1 = vector.shape_cast %0 : vector<1x64x340xbf16> to vector<64x340xbf16>
    %c0_2 = arith.constant 0 : index
    %c0_3 = arith.constant 0 : index
    %2 = vector.load %arg4[%c0_2, %c0_3] : memref<340x312xbf16, #tpu.memory_space<vmem>>, vector<340x312xbf16>
    %cst = arith.constant dense<0.000000e+00> : vector<64x312xf32>
    %3 = tpu.matmul %1, %2, %cst {dimension_numbers = #tpu.dot_dimension_numbers<[1], [0], [0], [1], [0, 0, 1, 1], [], []>} : vector<64x340xbf16>, vector<340x312xbf16>, vector<64x312xf32> -> vector<64x312xf32>
    %c0_4 = arith.constant 0 : index
    %c0_5 = arith.constant 0 : index
    %4 = vector.load %arg5[%c0_4, %c0_5] : memref<1x312xf32, #tpu.memory_space<vmem>>, vector<1x312xf32>
    %5 = vector.broadcast %4 : vector<1x312xf32> to vector<64x312xf32>
    %6 = arith.addf %3, %5 : vector<64x312xf32>
    %7 = vector.extract_strided_slice %6 {offsets = [0, 0], sizes = [64, 272], strides = [1, 1]} : vector<64x312xf32> to vector<64x272xf32>
    %8 = vector.extract_strided_slice %6 {offsets = [0, 272], sizes = [64, 20], strides = [1, 1]} : vector<64x312xf32> to vector<64x20xf32>
    %9 = vector.extract_strided_slice %6 {offsets = [0, 292], sizes = [64, 20], strides = [1, 1]} : vector<64x312xf32> to vector<64x20xf32>
    %10 = arith.mulf %7, %7 : vector<64x272xf32>
    %c0_6 = arith.constant 0 : index
    %c0_7 = arith.constant 0 : index
    %11 = vector.load %arg6[%c0_6, %c0_7] : memref<272x20xf32, #tpu.memory_space<vmem>>, vector<272x20xf32>
    %cst_8 = arith.constant dense<0.000000e+00> : vector<64x20xf32>
    %12 = tpu.matmul %10, %11, %cst_8 {dimension_numbers = #tpu.dot_dimension_numbers<[1], [0], [0], [1], [0, 0, 1, 1], [], []>} : vector<64x272xf32>, vector<272x20xf32>, vector<64x20xf32> -> vector<64x20xf32>
    %13 = arith.mulf %9, %9 : vector<64x20xf32>
    %14 = arith.subf %12, %13 : vector<64x20xf32>
    %15 = vector.extract_strided_slice %7 {offsets = [0, 0], sizes = [64, 256], strides = [1, 1]} : vector<64x272xf32> to vector<64x256xf32>
    %16 = vector.extract_strided_slice %7 {offsets = [0, 256], sizes = [64, 16], strides = [1, 1]} : vector<64x272xf32> to vector<64x16xf32>
    %17 = vector.extract_strided_slice %15 {offsets = [0, 0], sizes = [64, 128], strides = [1, 1]} : vector<64x256xf32> to vector<64x128xf32>
    %18 = vector.extract_strided_slice %15 {offsets = [0, 128], sizes = [64, 128], strides = [1, 1]} : vector<64x256xf32> to vector<64x128xf32>
    %19 = arith.maximumf %17, %18 : vector<64x128xf32>
    %20 = vector.extract_strided_slice %19 {offsets = [0, 0], sizes = [64, 64], strides = [1, 1]} : vector<64x128xf32> to vector<64x64xf32>
    %21 = vector.extract_strided_slice %19 {offsets = [0, 64], sizes = [64, 64], strides = [1, 1]} : vector<64x128xf32> to vector<64x64xf32>
    %22 = arith.maximumf %20, %21 : vector<64x64xf32>
    %23 = vector.extract_strided_slice %22 {offsets = [0, 0], sizes = [64, 32], strides = [1, 1]} : vector<64x64xf32> to vector<64x32xf32>
    %24 = vector.extract_strided_slice %22 {offsets = [0, 32], sizes = [64, 32], strides = [1, 1]} : vector<64x64xf32> to vector<64x32xf32>
    %25 = arith.maximumf %23, %24 : vector<64x32xf32>
    %26 = vector.extract_strided_slice %25 {offsets = [0, 0], sizes = [64, 16], strides = [1, 1]} : vector<64x32xf32> to vector<64x16xf32>
    %27 = vector.extract_strided_slice %25 {offsets = [0, 16], sizes = [64, 16], strides = [1, 1]} : vector<64x32xf32> to vector<64x16xf32>
    %28 = arith.maximumf %26, %27 : vector<64x16xf32>
    %29 = vector.extract_strided_slice %15 {offsets = [0, 0], sizes = [64, 128], strides = [1, 1]} : vector<64x256xf32> to vector<64x128xf32>
    %30 = vector.extract_strided_slice %15 {offsets = [0, 128], sizes = [64, 128], strides = [1, 1]} : vector<64x256xf32> to vector<64x128xf32>
    %31 = arith.minimumf %29, %30 : vector<64x128xf32>
    %32 = vector.extract_strided_slice %31 {offsets = [0, 0], sizes = [64, 64], strides = [1, 1]} : vector<64x128xf32> to vector<64x64xf32>
    %33 = vector.extract_strided_slice %31 {offsets = [0, 64], sizes = [64, 64], strides = [1, 1]} : vector<64x128xf32> to vector<64x64xf32>
    %34 = arith.minimumf %32, %33 : vector<64x64xf32>
    %35 = vector.extract_strided_slice %34 {offsets = [0, 0], sizes = [64, 32], strides = [1, 1]} : vector<64x64xf32> to vector<64x32xf32>
    %36 = vector.extract_strided_slice %34 {offsets = [0, 32], sizes = [64, 32], strides = [1, 1]} : vector<64x64xf32> to vector<64x32xf32>
    %37 = arith.minimumf %35, %36 : vector<64x32xf32>
    %38 = vector.extract_strided_slice %37 {offsets = [0, 0], sizes = [64, 16], strides = [1, 1]} : vector<64x32xf32> to vector<64x16xf32>
    %39 = vector.extract_strided_slice %37 {offsets = [0, 16], sizes = [64, 16], strides = [1, 1]} : vector<64x32xf32> to vector<64x16xf32>
    %40 = arith.minimumf %38, %39 : vector<64x16xf32>
    %41 = vector.extract_strided_slice %16 {offsets = [0, 0], sizes = [64, 8], strides = [1, 1]} : vector<64x16xf32> to vector<64x8xf32>
    %42 = vector.extract_strided_slice %16 {offsets = [0, 8], sizes = [64, 8], strides = [1, 1]} : vector<64x16xf32> to vector<64x8xf32>
    %43 = arith.maximumf %41, %42 : vector<64x8xf32>
    %44 = vector.extract_strided_slice %43 {offsets = [0, 0], sizes = [64, 4], strides = [1, 1]} : vector<64x8xf32> to vector<64x4xf32>
    %45 = vector.extract_strided_slice %43 {offsets = [0, 4], sizes = [64, 4], strides = [1, 1]} : vector<64x8xf32> to vector<64x4xf32>
    %46 = arith.maximumf %44, %45 : vector<64x4xf32>
    %47 = vector.extract_strided_slice %16 {offsets = [0, 0], sizes = [64, 8], strides = [1, 1]} : vector<64x16xf32> to vector<64x8xf32>
    %48 = vector.extract_strided_slice %16 {offsets = [0, 8], sizes = [64, 8], strides = [1, 1]} : vector<64x16xf32> to vector<64x8xf32>
    %49 = arith.minimumf %47, %48 : vector<64x8xf32>
    %50 = vector.extract_strided_slice %49 {offsets = [0, 0], sizes = [64, 4], strides = [1, 1]} : vector<64x8xf32> to vector<64x4xf32>
    %51 = vector.extract_strided_slice %49 {offsets = [0, 4], sizes = [64, 4], strides = [1, 1]} : vector<64x8xf32> to vector<64x4xf32>
    %52 = arith.minimumf %50, %51 : vector<64x4xf32>
    %c0_9 = arith.constant 0 : index
    %c0_10 = arith.constant 0 : index
    %c0_11 = arith.constant 0 : index
    %53 = vector.load %arg2[%c0_9, %c0_10, %c0_11] : memref<1x64x100xf32, #tpu.memory_space<vmem>>, vector<1x64x100xf32>
    %54 = vector.shape_cast %53 : vector<1x64x100xf32> to vector<64x100xf32>
    %cst_12 = arith.constant dense<0xFF800000> : vector<64xf32>
    %55 = vector.multi_reduction <maximumf>, %54, %cst_12 [1] : vector<64x100xf32> to vector<64xf32>
    %56 = vector.shape_cast %55 : vector<64xf32> to vector<64x1xf32>
    %cst_13 = arith.constant dense<0x7F800000> : vector<64xf32>
    %57 = vector.multi_reduction <minimumf>, %54, %cst_13 [1] : vector<64x100xf32> to vector<64xf32>
    %58 = vector.shape_cast %57 : vector<64xf32> to vector<64x1xf32>
    %cst_14 = arith.constant dense<0.000000e+00> : vector<64xf32>
    %59 = vector.multi_reduction <add>, %54, %cst_14 [1] : vector<64x100xf32> to vector<64xf32>
    %60 = vector.shape_cast %59 : vector<64xf32> to vector<64x1xf32>
    %cst_15 = arith.constant 0.00999999977 : f32
    %61 = vector.broadcast %cst_15 : f32 to vector<64x1xf32>
    %62 = arith.mulf %60, %61 : vector<64x1xf32>
    %63 = vector.broadcast %62 : vector<64x1xf32> to vector<64x100xf32>
    %64 = arith.subf %54, %63 : vector<64x100xf32>
    %65 = arith.mulf %64, %64 : vector<64x100xf32>
    %cst_16 = arith.constant dense<0.000000e+00> : vector<64xf32>
    %66 = vector.multi_reduction <add>, %65, %cst_16 [1] : vector<64x100xf32> to vector<64xf32>
    %67 = vector.shape_cast %66 : vector<64xf32> to vector<64x1xf32>
    %cst_17 = arith.constant 0.0101010101 : f32
    %68 = vector.broadcast %cst_17 : f32 to vector<64x1xf32>
    %69 = arith.mulf %67, %68 : vector<64x1xf32>
    %70 = tpu.concatenate %28, %40, %46, %52, %8, %14, %56, %58, %62, %69 in 1 : vector<64x16xf32>, vector<64x16xf32>, vector<64x4xf32>, vector<64x4xf32>, vector<64x20xf32>, vector<64x20xf32>, vector<64x1xf32>, vector<64x1xf32>, vector<64x1xf32>, vector<64x1xf32> -> vector<64x84xf32>
    %71 = arith.index_cast %arg1 : i32 to index
    %c0_18 = arith.constant 0 : index
    %c0_19 = arith.constant 0 : index
    %72 = vector.load %arg7[%71, %c0_18, %c0_19] : memref<4x84x128xf32, #tpu.memory_space<vmem>>, vector<1x84x128xf32>
    %73 = vector.shape_cast %72 : vector<1x84x128xf32> to vector<84x128xf32>
    %cst_20 = arith.constant dense<0.000000e+00> : vector<64x128xf32>
    %74 = tpu.matmul %70, %73, %cst_20 {dimension_numbers = #tpu.dot_dimension_numbers<[1], [0], [0], [1], [0, 0, 1, 1], [], []>} : vector<64x84xf32>, vector<84x128xf32>, vector<64x128xf32> -> vector<64x128xf32>
    %c0_i32 = arith.constant 0 : i32
    %75 = arith.cmpi eq, %arg1, %c0_i32 : i32
    %76 = arith.extui %75 : i1 to i32
    %c0_i32_21 = arith.constant 0 : i32
    %77 = arith.cmpi ne, %76, %c0_i32_21 : i32
    scf.if %77 {
      %c0_24 = arith.constant 0 : index
      %c0_25 = arith.constant 0 : index
      %81 = vector.load %arg8[%c0_24, %c0_25] : memref<1x128xf32, #tpu.memory_space<vmem>>, vector<1x128xf32>
      %82 = vector.broadcast %81 : vector<1x128xf32> to vector<64x128xf32>
      %83 = arith.addf %82, %74 : vector<64x128xf32>
      %c0_26 = arith.constant 0 : index
      %c0_27 = arith.constant 0 : index
      %84 = vector.load %arg9[%c0_26, %c0_27] : memref<64x128xf32, #tpu.memory_space<vmem>>, vector<64x128xf32>
      tpu.vector_store %arg9[%c0_26, %c0_27], %83 {strides = array<i32>} : memref<64x128xf32, #tpu.memory_space<vmem>>, vector<64x128xf32>,
    } else {
    }
    %c0_i32_22 = arith.constant 0 : i32
    %78 = arith.cmpi sgt, %arg1, %c0_i32_22 : i32
    %79 = arith.extui %78 : i1 to i32
    %c0_i32_23 = arith.constant 0 : i32
    %80 = arith.cmpi ne, %79, %c0_i32_23 : i32
    scf.if %80 {
      %c0_24 = arith.constant 0 : index
      %c0_25 = arith.constant 0 : index
      %81 = vector.load %arg9[%c0_24, %c0_25] : memref<64x128xf32, #tpu.memory_space<vmem>>, vector<64x128xf32>
      %82 = arith.addf %81, %74 : vector<64x128xf32>
      %c0_26 = arith.constant 0 : index
      %c0_27 = arith.constant 0 : index
      %83 = vector.load %arg9[%c0_26, %c0_27] : memref<64x128xf32, #tpu.memory_space<vmem>>, vector<64x128xf32>
      tpu.vector_store %arg9[%c0_26, %c0_27], %82 {strides = array<i32>} : memref<64x128xf32, #tpu.memory_space<vmem>>, vector<64x128xf32>,
    } else {
    }
    return
  }
  func.func @transform_0(%arg0: i32, %arg1: i32) -> (i32, i32, i32) {
    %c0_i32 = arith.constant 0 : i32
    %c0_i32_0 = arith.constant 0 : i32
    return %arg1, %arg0, %c0_i32 : i32, i32, i32
  }
  func.func @transform_1(%arg0: i32, %arg1: i32) -> (i32, i32, i32) {
    %c0_i32 = arith.constant 0 : i32
    %c0_i32_0 = arith.constant 0 : i32
    return %arg1, %arg0, %c0_i32 : i32, i32, i32
  }
  func.func @transform_2(%arg0: i32, %arg1: i32) -> (i32, i32) {
    %c0_i32 = arith.constant 0 : i32
    %c0_i32_0 = arith.constant 0 : i32
    %c0_i32_1 = arith.constant 0 : i32
    return %c0_i32, %c0_i32_0 : i32, i32
  }
  func.func @transform_3(%arg0: i32, %arg1: i32) -> (i32, i32) {
    %c0_i32 = arith.constant 0 : i32
    %c0_i32_0 = arith.constant 0 : i32
    %c0_i32_1 = arith.constant 0 : i32
    return %c0_i32, %c0_i32_0 : i32, i32
  }
  func.func @transform_4(%arg0: i32, %arg1: i32) -> (i32, i32) {
    %c0_i32 = arith.constant 0 : i32
    %c0_i32_0 = arith.constant 0 : i32
    %c0_i32_1 = arith.constant 0 : i32
    return %c0_i32, %c0_i32_0 : i32, i32
  }
  func.func @transform_5(%arg0: i32, %arg1: i32) -> (i32, i32, i32) {
    %c0_i32 = arith.constant 0 : i32
    %c0_i32_0 = arith.constant 0 : i32
    %c0_i32_1 = arith.constant 0 : i32
    %c0_i32_2 = arith.constant 0 : i32
    return %c0_i32, %c0_i32_0, %c0_i32_1 : i32, i32, i32
  }
  func.func @transform_6(%arg0: i32, %arg1: i32) -> (i32, i32) {
    %c0_i32 = arith.constant 0 : i32
    %c0_i32_0 = arith.constant 0 : i32
    %c0_i32_1 = arith.constant 0 : i32
    return %c0_i32, %c0_i32_0 : i32, i32
  }
  func.func @transform_7(%arg0: i32, %arg1: i32) -> (i32, i32) {
    %c0_i32 = arith.constant 0 : i32
    %c0_i32_0 = arith.constant 0 : i32
    return %arg0, %c0_i32 : i32, i32
  }
}

</mosaic_0001>

<llo_original>
// kernel: tile.23
$region0: #{tile.23}
  #allocation0 [shape = 's32[1]{0}', space=sflag, size = 0x4, scoped, tag = 'scoped memory for tile.23']
  %s0 = inlined_call_operand.vmem [shape: f32[16], index: 0, kind: input, shape index: {}]
  %s1 = inlined_call_operand.vmem [shape: f32[16,16], index: 1, kind: output, shape index: {}]
  // Predicated region
  $region2: #{tile.23} parent=0 // pred_check
    _
  $region3: #{tile.23} parent=0 // pred_check_branch
    %3 = sbr.rel (0) target = $region5
  $region4: #{tile.23} parent=0 // pred_region
    _
  $region5: #{tile.23} parent=0 // pred_fallthru
    _
  %v4 = vld [vmem:[%s0] ss:$0 sm:$0xff]
  %5 = vst [vmem:[%s1] sm:$0xff] %v4
  %s6 = scalar_lea.vmem %s1, 8
  %7 = vst [vmem:[%s6] sm:$0xff] %v4

// kernel: tile.24
$region0: #{tile.24}
  %s0 = inlined_call_operand.vmem [shape: f32[16,16], index: 0, kind: input, shape index: {}]
  %s1 = inlined_call_operand.vmem [shape: f32[256], index: 1, kind: output, shape index: {}]
  $region1: #{tile.24} parent=0
    #allocation0 [shape = 'u8[4096]{0}', space=vmem, size = 0x1000, scoped, tag = 'scoped mem for output reshape']
    %s2 = smov 3
    %v3 = vld [vmem:[%s0] ss:$8 sm:%s2]
    %vm4 = vcmask 130048
    %5 = vst.msk [vmem:[#allocation0] sm:$0x3] %vm4, %v3
    %s6 = scalar_lea.vmem %s0, 7
    %s7 = smov 3
    %v8 = vld [vmem:[%s6] ss:$8 sm:%s7]
    %9 = vrot.lane.b32.xlu0 %v8, 112
    %v10 = vpop.permute.xlu0 %9
    %vm11 = vcmask 1048448
    %12 = vst.msk [vmem:[#allocation0] sm:$0x3] %vm11, %v10
    %s13 = scalar_lea.vmem %s0, 6
    %s14 = smov 3
    %v15 = vld [vmem:[%s13] ss:$8 sm:%s14]
    %16 = vrot.lane.b32.xlu0 %v15, 96
    %v17 = vpop.permute.xlu0 %16
    %vm18 = vcmask 917248
    %19 = vst.msk [vmem:[#allocation0] sm:$0x3] %vm18, %v17
    %s20 = scalar_lea.vmem %s0, 5
    %s21 = smov 3
    %v22 = vld [vmem:[%s20] ss:$8 sm:%s21]
    %23 = vrot.lane.b32.xlu0 %v22, 80
    %v24 = vpop.permute.xlu0 %23
    %vm25 = vcmask 786048
    %26 = vst.msk [vmem:[#allocation0] sm:$0x3] %vm25, %v24
    %s27 = scalar_lea.vmem %s0, 4
    %s28 = smov 3
    %v29 = vld [vmem:[%s27] ss:$8 sm:%s28]
    %30 = vrot.lane.b32.xlu0 %v29, 64
    %v31 = vpop.permute.xlu0 %30
    %vm32 = vcmask 654848
    %33 = vst.msk [vmem:[#allocation0] sm:$0x3] %vm32, %v31
    %s34 = scalar_lea.vmem %s0, 3
    %s35 = smov 3
    %v36 = vld [vmem:[%s34] ss:$8 sm:%s35]
    %37 = vrot.lane.b32.xlu0 %v36, 48
    %v38 = vpop.permute.xlu0 %37
    %vm39 = vcmask 523648
    %40 = vst.msk [vmem:[#allocation0] sm:$0x3] %vm39, %v38
    %s41 = scalar_lea.vmem %s0, 2
    %s42 = smov 3
    %v43 = vld [vmem:[%s41] ss:$8 sm:%s42]
    %44 = vrot.lane.b32.xlu0 %v43, 32
    %v45 = vpop.permute.xlu0 %44
    %vm46 = vcmask 392448
    %47 = vst.msk [vmem:[#allocation0] sm:$0x3] %vm46, %v45
    %s48 = scalar_lea.vmem %s0, 1
    %s49 = smov 3
    %v50 = vld [vmem:[%s48] ss:$8 sm:%s49]
    %51 = vrot.lane.b32.xlu0 %v50, 16
    %v52 = vpop.permute.xlu0 %51
    %vm53 = vcmask 261248
    %54 = vst.msk [vmem:[#allocation0] sm:$0x3] %vm53, %v52
    %s56 = sshll.u32 1, 2
    %s57 = ssub.s32 %s56, 1
    %v59 = vld [vmem:[#allocation0] sm:%s57]
    %s60 = sshll.u32 1, 2
    %s61 = ssub.s32 %s60, 1
    %62 = vst [vmem:[%s1] sm:%s61] %v59

// kernel: tile.28
$region0: #{tile.28}
  #allocation0 [shape = 's32[1]{0}', space=sflag, size = 0x4, scoped, tag = 'scoped memory for tile.28']
  %s0 = inlined_call_operand.vmem [shape: f32[4], index: 0, kind: input, shape index: {}]
  %s1 = inlined_call_operand.vmem [shape: f32[4,4], index: 1, kind: output, shape index: {}]
  // Predicated region
  $region2: #{tile.28} parent=0 // pred_check
    _
  $region3: #{tile.28} parent=0 // pred_check_branch
    %3 = sbr.rel (0) target = $region5
  $region4: #{tile.28} parent=0 // pred_region
    _
  $region5: #{tile.28} parent=0 // pred_fallthru
    _
  %v4 = vld [vmem:[%s0] ss:$0 sm:$0xff]
  %5 = vst [vmem:[%s1] sm:$0xf] %v4

// kernel: tile.29
$region0: #{tile.29}
  %s0 = inlined_call_operand.vmem [shape: f32[4,4], index: 0, kind: input, shape index: {}]
  %s1 = inlined_call_operand.vmem [shape: f32[16], index: 1, kind: output, shape index: {}]
  $region1: #{tile.29} parent=0
    #allocation0 [shape = 'u8[4096]{0}', space=vmem, size = 0x1000, scoped, tag = 'scoped mem for output reshape']
    #allocation1 [shape = 'u8[4096]{0}', space=vmem, size = 0x1000, scoped, tag = 'scoped mem for input reshape']
    %s3 = sshll.u32 1, 4
    %s4 = ssub.s32 %s3, 1
    %v5 = vld [vmem:[%s0] sm:%s4]
    %6 = vst [vmem:[#allocation1] sm:%s4] %v5
    %v7 = vld [vmem:[#allocation1] sm:$0x1]
    %vm8 = vcmask 31744
    %9 = vst.msk [vmem:[#allocation0] sm:$0x1] %vm8, %v7
    %s10 = scalar_lea.vmem [#allocation1], 3
    %v11 = vld [vmem:[%s10] sm:$0x1]
    %12 = vrot.lane.b32.xlu0 %v11, 12
    %v13 = vpop.permute.xlu0 %12
    %vm14 = vcmask 130144
    %15 = vst.msk [vmem:[#allocation0] sm:$0x1] %vm14, %v13
    %s16 = scalar_lea.vmem [#allocation1], 2
    %v17 = vld [vmem:[%s16] sm:$0x1]
    %18 = vrot.lane.b32.xlu0 %v17, 8
    %v19 = vpop.permute.xlu0 %18
    %vm20 = vcmask 97344
    %21 = vst.msk [vmem:[#allocation0] sm:$0x1] %vm20, %v19
    %s22 = scalar_lea.vmem [#allocation1], 1
    %v23 = vld [vmem:[%s22] sm:$0x1]
    %24 = vrot.lane.b32.xlu0 %v23, 4
    %v25 = vpop.permute.xlu0 %24
    %vm26 = vcmask 64544
    %27 = vst.msk [vmem:[#allocation0] sm:$0x1] %vm26, %v25
    %s29 = sshll.u32 1, 1
    %s30 = ssub.s32 %s29, 1
    %v32 = vld [vmem:[#allocation0] sm:%s30]
    %s33 = sshll.u32 1, 1
    %s34 = ssub.s32 %s33, 1
    %35 = vst [vmem:[%s1] sm:%s34] %v32

// kernel: cspp_sid_forward.1
$region0: #{cspp_sid_forward.1}
  #allocation0 [shape = 'u32[]', space=smem, size = 0x4, offset = 0x4, fixed_abs, tag = 'smem constant byte address 0x4 - core index']
  #allocation1 [shape = 'u32[144,128]{1,0:T(1,128)}', space=vmem, size = 0x12000, scoped, tag = 'internal scratch']
  %s0 = inlined_call_operand.vmem [shape: f32[4,128,100], index: 0, kind: input, shape index: {}]
  %s1 = inlined_call_operand.vmem [shape: bf16[4,128,340], index: 1, kind: input, shape index: {}]
  %s2 = inlined_call_operand.vmem [shape: bf16[340,312], index: 2, kind: input, shape index: {}]
  %s3 = inlined_call_operand.vmem [shape: f32[1,312], index: 3, kind: input, shape index: {}]
  %s4 = inlined_call_operand.vmem [shape: f32[272,20], index: 4, kind: input, shape index: {}]
  %s5 = inlined_call_operand.vmem [shape: f32[4,84,128], index: 5, kind: input, shape index: {}]
  %s6 = inlined_call_operand.vmem [shape: f32[1,128], index: 6, kind: input, shape index: {}]
  %s7 = inlined_call_operand.hbm [shape: f32[128,128], index: 7, kind: output, shape index: {}]
  %s8 = sld [smem:[#allocation0]]
  $region69: #{cspp_sid_forward.1} parent=0
    _
  %s10 = ssub.s32 1, %s8
  %s11 = scalar_select 0, %s10, %s8
  $region1: #{cspp_sid_forward.1} parent=0
    #allocation2 [shape = 'u8[65536]{0}', space=vmem, size = 0x10000, scoped, tag = 'output window, operand 0']
    #allocation3 [shape = 's32[2]{0}', space=sflag, size = 0x8, scoped, tag = 'scoped memory for cspp_sid_forward.1']
    %12 = vsyncpa [#allocation3], 0
    %s13 = scalar_lea.sflag [#allocation3], 1
    %14 = vsyncpa %s13, 0
    loop: start=0, step=1, limit=10
    $region2: #{cspp_sid_forward.1} parent=1 // loop_pre_header
      _
    $region3: #{cspp_sid_forward.1} parent=1 // loop_header
      %s16 = sphi 0, %s20
      %p17 = scmp.ge.s32.totalorder %s16, 10
      %s23 = sphi 0, %s35
      %s24 = sphi 0, %s31
      %s25 = sphi 0, %s23
      %s26 = sphi 0, %s24
      %s27 = sphi 0, %s25
      %s28 = sphi 0, %s26
      %s40 = sphi 0, %s42
      %s43 = sphi 0, %s40
      %s44 = sphi 0, %s43
      %s60 = sphi 0, %s44
      %s68 = sphi 0, %s70
      %s71 = sphi 0, %s68
      %s72 = sphi 0, %s71
      %s88 = sphi 0, %s72
      %s92 = sphi 0, %s92
      %s94 = sphi 0, %s92
      %s95 = sphi 0, %s94
      %s109 = sphi 0, %s95
      %s113 = sphi 0, %s113
      %s115 = sphi 0, %s113
      %s116 = sphi 0, %s115
      %s130 = sphi 0, %s116
      %s134 = sphi 0, %s134
      %s136 = sphi 0, %s134
      %s137 = sphi 0, %s136
      %s151 = sphi 0, %s137
      %s155 = sphi 0, %s155
      %s157 = sphi 0, %s155
      %s158 = sphi 0, %s157
      %s172 = sphi 0, %s158
      %s176 = sphi 0, %s176
      %s178 = sphi 0, %s176
      %s179 = sphi 0, %s178
      %s193 = sphi 0, %s179
      %s199 = sphi 0, %s201
      %s202 = sphi 0, %s199
      %s203 = sphi 0, %s202
      %s219 = sphi 0, %s203
    $region4: #{cspp_sid_forward.1} parent=1 // loop_header_branch
      %19 = sbr.rel (%p17) target = $region8
    $region5: #{cspp_sid_forward.1} parent=1 // loop_body
      %s21 = ssub.s32 %s16, 1
      %s22 = ssub.s32 %s16, 2
      %s29 = sadd.s32 1, %s24
      %p30 = scmp.ge.s32.totalorder %s29, 4
      %s31 = scalar_select %p30, 0, %s29
      %s32 = sadd.s32 1, %s23
      %s33 = scalar_select %p30, %s32, %s23
      %p34 = scmp.ge.s32.totalorder %s33, 2
      %s35 = scalar_select %p34, 0, %s33
      %s36 = ssub.s32 %s24, %s31
      %s37 = ssub.s32 %s23, %s35
      %s38 = sor.u32 %s36, %s37
      %p39 = scmp.eq.s32.totalorder %s38, 0
      %s41 = sadd.s32 %s40, 1
      %s42 = scalar_select %p39, %s40, %s41
      %p45 = pneg %p39
      %p46 = scmp.eq.s32.totalorder %s16, 7
      %p47 = por %p45, %p46
      %p48 = scmp.ne.s32.totalorder %s40, %s43
      %p49 = scmp.eq.s32.totalorder %s16, 0
      %p50 = por %p48, %p49
      %p51 = scmp.ne.s32.totalorder %s40, %s43
      %p52 = scmp.eq.s32.totalorder %s21, 7
      %p53 = por %p51, %p52
      %p54 = scmp.ne.s32.totalorder %s43, %s44
      %p55 = scmp.eq.s32.totalorder %s21, 0
      %p56 = por %p54, %p55
      %p57 = scmp.ne.s32.totalorder %s43, %s44
      %p58 = scmp.eq.s32.totalorder %s22, 7
      %p59 = por %p57, %p58
      %p61 = scmp.ne.s32.totalorder %s44, %s60
      %p62 = scmp.eq.s32.totalorder %s22, 0
      %p63 = por %p61, %p62
      %s64 = ssub.s32 %s24, %s31
      %s65 = ssub.s32 %s23, %s35
      %s66 = sor.u32 %s64, %s65
      %p67 = scmp.eq.s32.totalorder %s66, 0
      %s69 = sadd.s32 %s68, 1
      %s70 = scalar_select %p67, %s68, %s69
      %p73 = pneg %p67
      %p74 = scmp.eq.s32.totalorder %s16, 7
      %p75 = por %p73, %p74
      %p76 = scmp.ne.s32.totalorder %s68, %s71
      %p77 = scmp.eq.s32.totalorder %s16, 0
      %p78 = por %p76, %p77
      %p79 = scmp.ne.s32.totalorder %s68, %s71
      %p80 = scmp.eq.s32.totalorder %s21, 7
      %p81 = por %p79, %p80
      %p82 = scmp.ne.s32.totalorder %s71, %s72
      %p83 = scmp.eq.s32.totalorder %s21, 0
      %p84 = por %p82, %p83
      %p85 = scmp.ne.s32.totalorder %s71, %s72
      %p86 = scmp.eq.s32.totalorder %s22, 7
      %p87 = por %p85, %p86
      %p89 = scmp.ne.s32.totalorder %s72, %s88
      %p90 = scmp.eq.s32.totalorder %s22, 0
      %p91 = por %p89, %p90
      %s93 = sadd.s32 %s92, 1
      %p96 = scmp.eq.s32.totalorder %s16, 7
      %p97 = scmp.ne.s32.totalorder %s92, %s94
      %p98 = scmp.eq.s32.totalorder %s16, 0
      %p99 = por %p97, %p98
      %p100 = scmp.ne.s32.totalorder %s92, %s94
      %p101 = scmp.eq.s32.totalorder %s21, 7
      %p102 = por %p100, %p101
      %p103 = scmp.ne.s32.totalorder %s94, %s95
      %p104 = scmp.eq.s32.totalorder %s21, 0
      %p105 = por %p103, %p104
      %p106 = scmp.ne.s32.totalorder %s94, %s95
      %p107 = scmp.eq.s32.totalorder %s22, 7
      %p108 = por %p106, %p107
      %p110 = scmp.ne.s32.totalorder %s95, %s109
      %p111 = scmp.eq.s32.totalorder %s22, 0
      %p112 = por %p110, %p111
      %s114 = sadd.s32 %s113, 1
      %p117 = scmp.eq.s32.totalorder %s16, 7
      %p118 = scmp.ne.s32.totalorder %s113, %s115
      %p119 = scmp.eq.s32.totalorder %s16, 0
      %p120 = por %p118, %p119
      %p121 = scmp.ne.s32.totalorder %s113, %s115
      %p122 = scmp.eq.s32.totalorder %s21, 7
      %p123 = por %p121, %p122
      %p124 = scmp.ne.s32.totalorder %s115, %s116
      %p125 = scmp.eq.s32.totalorder %s21, 0
      %p126 = por %p124, %p125
      %p127 = scmp.ne.s32.totalorder %s115, %s116
      %p128 = scmp.eq.s32.totalorder %s22, 7
      %p129 = por %p127, %p128
      %p131 = scmp.ne.s32.totalorder %s116, %s130
      %p132 = scmp.eq.s32.totalorder %s22, 0
      %p133 = por %p131, %p132
      %s135 = sadd.s32 %s134, 1
      %p138 = scmp.eq.s32.totalorder %s16, 7
      %p139 = scmp.ne.s32.totalorder %s134, %s136
      %p140 = scmp.eq.s32.totalorder %s16, 0
      %p141 = por %p139, %p140
      %p142 = scmp.ne.s32.totalorder %s134, %s136
      %p143 = scmp.eq.s32.totalorder %s21, 7
      %p144 = por %p142, %p143
      %p145 = scmp.ne.s32.totalorder %s136, %s137
      %p146 = scmp.eq.s32.totalorder %s21, 0
      %p147 = por %p145, %p146
      %p148 = scmp.ne.s32.totalorder %s136, %s137
      %p149 = scmp.eq.s32.totalorder %s22, 7
      %p150 = por %p148, %p149
      %p152 = scmp.ne.s32.totalorder %s137, %s151
      %p153 = scmp.eq.s32.totalorder %s22, 0
      %p154 = por %p152, %p153
      %s156 = sadd.s32 %s155, 1
      %p159 = scmp.eq.s32.totalorder %s16, 7
      %p160 = scmp.ne.s32.totalorder %s155, %s157
      %p161 = scmp.eq.s32.totalorder %s16, 0
      %p162 = por %p160, %p161
      %p163 = scmp.ne.s32.totalorder %s155, %s157
      %p164 = scmp.eq.s32.totalorder %s21, 7
      %p165 = por %p163, %p164
      %p166 = scmp.ne.s32.totalorder %s157, %s158
      %p167 = scmp.eq.s32.totalorder %s21, 0
      %p168 = por %p166, %p167
      %p169 = scmp.ne.s32.totalorder %s157, %s158
      %p170 = scmp.eq.s32.totalorder %s22, 7
      %p171 = por %p169, %p170
      %p173 = scmp.ne.s32.totalorder %s158, %s172
      %p174 = scmp.eq.s32.totalorder %s22, 0
      %p175 = por %p173, %p174
      %s177 = sadd.s32 %s176, 1
      %p180 = scmp.eq.s32.totalorder %s16, 7
      %p181 = scmp.ne.s32.totalorder %s176, %s178
      %p182 = scmp.eq.s32.totalorder %s16, 0
      %p183 = por %p181, %p182
      %p184 = scmp.ne.s32.totalorder %s176, %s178
      %p185 = scmp.eq.s32.totalorder %s21, 7
      %p186 = por %p184, %p185
      %p187 = scmp.ne.s32.totalorder %s178, %s179
      %p188 = scmp.eq.s32.totalorder %s21, 0
      %p189 = por %p187, %p188
      %p190 = scmp.ne.s32.totalorder %s178, %s179
      %p191 = scmp.eq.s32.totalorder %s22, 7
      %p192 = por %p190, %p191
      %p194 = scmp.ne.s32.totalorder %s179, %s193
      %p195 = scmp.eq.s32.totalorder %s22, 0
      %p196 = por %p194, %p195
      %s197 = ssub.s32 %s23, %s35
      %p198 = scmp.eq.s32.totalorder %s197, 0
      %s200 = sadd.s32 %s199, 1
      %s201 = scalar_select %p198, %s199, %s200
      %p204 = pneg %p198
      %p205 = scmp.eq.s32.totalorder %s16, 7
      %p206 = por %p204, %p205
      %p207 = scmp.ne.s32.totalorder %s199, %s202
      %p208 = scmp.eq.s32.totalorder %s16, 0
      %p209 = por %p207, %p208
      %p210 = scmp.ne.s32.totalorder %s199, %s202
      %p211 = scmp.eq.s32.totalorder %s21, 7
      %p212 = por %p210, %p211
      %p213 = scmp.ne.s32.totalorder %s202, %s203
      %p214 = scmp.eq.s32.totalorder %s21, 0
      %p215 = por %p213, %p214
      %p216 = scmp.ne.s32.totalorder %s202, %s203
      %p217 = scmp.eq.s32.totalorder %s22, 7
      %p218 = por %p216, %p217
      %p220 = scmp.ne.s32.totalorder %s203, %s219
      %p221 = scmp.eq.s32.totalorder %s22, 0
      %p222 = por %p220, %p221
      %p223 = scmp.le.s32.totalorder 1, %s16
      %p224 = scmp.lt.s32.totalorder %s16, 9
      %p225 = pnand %p223, %p224
      %p226 = pneg %p225
      // Predicated region
      $region9: #{cspp_sid_forward.1} parent=5 // pred_check
        _
      $region10: #{cspp_sid_forward.1} parent=5 // pred_check_branch
        %228 = sbr.rel (%p225) target = $region12
      $region11: #{cspp_sid_forward.1} parent=5 // pred_region
        %s229 = ssub.s32 %s16, 1
        // Predicated region
        $region13: #{cspp_sid_forward.1} parent=11 // pred_check
          %p230 = pneg %p105
        $region14: #{cspp_sid_forward.1} parent=11 // pred_check_branch
          %232 = sbr.rel (%p230) target = $region16
        $region15: #{cspp_sid_forward.1} parent=11 // pred_region
          _
        $region16: #{cspp_sid_forward.1} parent=11 // pred_fallthru
          _
        // Predicated region
        $region17: #{cspp_sid_forward.1} parent=11 // pred_check
          %p233 = pneg %p126
        $region18: #{cspp_sid_forward.1} parent=11 // pred_check_branch
          %235 = sbr.rel (%p233) target = $region20
        $region19: #{cspp_sid_forward.1} parent=11 // pred_region
          _
        $region20: #{cspp_sid_forward.1} parent=11 // pred_fallthru
          _
        // Predicated region
        $region21: #{cspp_sid_forward.1} parent=11 // pred_check
          %p236 = pneg %p147
        $region22: #{cspp_sid_forward.1} parent=11 // pred_check_branch
          %238 = sbr.rel (%p236) target = $region24
        $region23: #{cspp_sid_forward.1} parent=11 // pred_region
          _
        $region24: #{cspp_sid_forward.1} parent=11 // pred_fallthru
          _
        // Predicated region
        $region25: #{cspp_sid_forward.1} parent=11 // pred_check
          %p239 = pneg %p168
        $region26: #{cspp_sid_forward.1} parent=11 // pred_check_branch
          %241 = sbr.rel (%p239) target = $region28
        $region27: #{cspp_sid_forward.1} parent=11 // pred_region
          _
        $region28: #{cspp_sid_forward.1} parent=11 // pred_fallthru
          _
        // Predicated region
        $region29: #{cspp_sid_forward.1} parent=11 // pred_check
          %p242 = pneg %p189
        $region30: #{cspp_sid_forward.1} parent=11 // pred_check_branch
          %244 = sbr.rel (%p242) target = $region32
        $region31: #{cspp_sid_forward.1} parent=11 // pred_region
          _
        $region32: #{cspp_sid_forward.1} parent=11 // pred_fallthru
          _
      $region12: #{cspp_sid_forward.1} parent=5 // pred_fallthru
        _
      %p245 = scmp.lt.s32.totalorder %s16, 8
      // Predicated region
      $region33: #{cspp_sid_forward.1} parent=5 // pred_check
        %p246 = pneg %p245
      $region34: #{cspp_sid_forward.1} parent=5 // pred_check_branch
        %248 = sbr.rel (%p246) target = $region36
      $region35: #{cspp_sid_forward.1} parent=5 // pred_region
        // Predicated region
        $region37: #{cspp_sid_forward.1} parent=35 // pred_check
          %p249 = pneg %p50
        $region38: #{cspp_sid_forward.1} parent=35 // pred_check_branch
          %251 = sbr.rel (%p249) target = $region40
        $region39: #{cspp_sid_forward.1} parent=35 // pred_region
          %s252 = smul.u32 8, %s23
          %p253 = scmp.lt.s32.totalorder %s24, 3
          %s254 = scalar_select %p253, %s24, 3
          %p255 = scmp.lt.s32.totalorder %s252, 15
          %s256 = scalar_select %p255, %s252, 15
          %s257 = smul.addr %s254, 16
          %s258 = sadd.s32 %s256, %s257
          %s259 = smul.addr %s258, 8
          %s260 = scalar_lea.vmem %s0, %s259
          %s261 = smul.u32 8, %s23
        $region40: #{cspp_sid_forward.1} parent=35 // pred_fallthru
          _
        // Predicated region
        $region41: #{cspp_sid_forward.1} parent=35 // pred_check
          %p262 = pneg %p78
        $region42: #{cspp_sid_forward.1} parent=35 // pred_check_branch
          %264 = sbr.rel (%p262) target = $region44
        $region43: #{cspp_sid_forward.1} parent=35 // pred_region
          %s265 = smul.u32 8, %s23
          %p266 = scmp.lt.s32.totalorder %s24, 3
          %s267 = scalar_select %p266, %s24, 3
          %p268 = scmp.lt.s32.totalorder %s265, 15
          %s269 = scalar_select %p268, %s265, 15
          %s270 = smul.addr %s269, 3
          %s271 = smul.addr %s267, 48
          %s272 = sadd.s32 %s270, %s271
          %s273 = smul.addr %s272, 4
          %s274 = scalar_lea.vmem %s1, %s273
          %s275 = smul.u32 8, %s23
        $region44: #{cspp_sid_forward.1} parent=35 // pred_fallthru
          _
      $region36: #{cspp_sid_forward.1} parent=5 // pred_fallthru
        _
      %p276 = scmp.le.s32.totalorder 1, %s16
      %p277 = scmp.lt.s32.totalorder %s16, 9
      %p278 = pnand %p276, %p277
      %p279 = pneg %p278
      // Predicated region
      $region45: #{cspp_sid_forward.1} parent=5 // pred_check
        _
      $region46: #{cspp_sid_forward.1} parent=5 // pred_check_branch
        %281 = sbr.rel (%p278) target = $region48
      $region47: #{cspp_sid_forward.1} parent=5 // pred_region
        %s282 = ssub.s32 %s16, 1
        %s283 = smul.u32 8, %s25
        %p284 = scmp.lt.s32.totalorder %s26, 3
        %s285 = scalar_select %p284, %s26, 3
        %p286 = scmp.lt.s32.totalorder %s283, 15
        %s287 = scalar_select %p286, %s283, 15
        %s288 = smul.addr %s285, 16
        %s289 = sadd.s32 %s287, %s288
        %s290 = smul.addr %s289, 8
        %s291 = scalar_lea.vmem %s0, %s290
        %p292 = pneg %p56
        %p293 = pneg %p53
        %s294 = smul.u32 8, %s25
        %p295 = scmp.lt.s32.totalorder %s26, 3
        %s296 = scalar_select %p295, %s26, 3
        %p297 = scmp.lt.s32.totalorder %s294, 15
        %s298 = scalar_select %p297, %s294, 15
        %s299 = smul.addr %s298, 3
        %s300 = smul.addr %s296, 48
        %s301 = sadd.s32 %s299, %s300
        %s302 = smul.addr %s301, 4
        %s303 = scalar_lea.vmem %s1, %s302
        %p304 = pneg %p84
        %p305 = pneg %p81
        %p306 = pneg %p105
        %p307 = pneg %p102
        %p308 = pneg %p126
        %p309 = pneg %p123
        %p310 = pneg %p147
        %p311 = pneg %p144
        %p312 = pneg %p168
        %p313 = pneg %p165
        %p314 = pneg %p189
        %p315 = pneg %p186
        %p316 = pneg %p215
        %p317 = pneg %p212
        %s318 = sand.u32 %s202, 1
        %s319 = scalar_lea.sflag [#allocation3], %s318
        %s320 = sand.u32 %s202, 1
        %s321 = smul.addr %s320, 64
        %s322 = scalar_lea.vmem [#allocation2], %s321
        %s323 = smul.u32 8, %s25
        %p324 = scmp.lt.s32.totalorder %s26, 3
        %s325 = scalar_select %p324, %s26, 3
        %p326 = scmp.lt.s32.totalorder %s323, 15
        %s327 = scalar_select %p326, %s323, 15
        %s328 = smul.addr %s325, 16
        %s329 = sadd.s32 %s327, %s328
        %s330 = smul.addr %s329, 8
        %s331 = scalar_lea.vmem %s0, %s330
        %s332 = smul.u32 8, %s25
        %s333 = smul.u32 8, %s25
        %p334 = scmp.lt.s32.totalorder %s26, 3
        %s335 = scalar_select %p334, %s26, 3
        %p336 = scmp.lt.s32.totalorder %s333, 15
        %s337 = scalar_select %p336, %s333, 15
        %s338 = smul.addr %s337, 3
        %s339 = smul.addr %s335, 48
        %s340 = sadd.s32 %s338, %s339
        %s341 = smul.addr %s340, 4
        %s342 = scalar_lea.vmem %s1, %s341
        %s343 = smul.u32 8, %s25
        %s344 = smul.u32 8, %s25
        %v346 = vld [vmem:[%s342] sm:$0xff]
        %v347 = vld [vmem:[%s342 + $0x8] sm:$0xf]
        %v348 = vld [vmem:[%s342 + $0xc] sm:$0xff]
        %v349 = vld [vmem:[%s342 + $0x14] sm:$0xf]
        %v350 = vld [vmem:[%s342 + $0x18] sm:$0xff]
        %v351 = vld [vmem:[%s342 + $0x20] sm:$0xf]
        %v352 = vld [vmem:[%s342 + $0x24] sm:$0xff]
        %v353 = vld [vmem:[%s342 + $0x2c] sm:$0xf]
        %v354 = vld [vmem:[%s342 + $0x30] sm:$0xff]
        %v355 = vld [vmem:[%s342 + $0x38] sm:$0xf]
        %v356 = vld [vmem:[%s342 + $0x3c] sm:$0xff]
        %v357 = vld [vmem:[%s342 + $0x44] sm:$0xf]
        %v358 = vld [vmem:[%s342 + $0x48] sm:$0xff]
        %v359 = vld [vmem:[%s342 + $0x50] sm:$0xf]
        %v360 = vld [vmem:[%s342 + $0x54] sm:$0xff]
        %v361 = vld [vmem:[%s342 + $0x5c] sm:$0xf]
        %v362 = vld [vmem:[%s2] sm:$0xff]
        %v363 = vld [vmem:[%s2 + $0x8] sm:$0xf]
        %v364 = vld [vmem:[%s2 + $0xc] sm:$0xff]
        %v365 = vld [vmem:[%s2 + $0x14] sm:$0xf]
        %v366 = vld [vmem:[%s2 + $0x18] sm:$0xff]
        %v367 = vld [vmem:[%s2 + $0x20] sm:$0xf]
        %v368 = vld [vmem:[%s2 + $0x24] sm:$0xff]
        %v369 = vld [vmem:[%s2 + $0x2c] sm:$0xf]
        %v370 = vld [vmem:[%s2 + $0x30] sm:$0xff]
        %v371 = vld [vmem:[%s2 + $0x38] sm:$0xf]
        %v372 = vld [vmem:[%s2 + $0x3c] sm:$0xff]
        %v373 = vld [vmem:[%s2 + $0x44] sm:$0xf]
        %v374 = vld [vmem:[%s2 + $0x48] sm:$0xff]
        %v375 = vld [vmem:[%s2 + $0x50] sm:$0xf]
        %v376 = vld [vmem:[%s2 + $0x54] sm:$0xff]
        %v377 = vld [vmem:[%s2 + $0x5c] sm:$0xf]
        %v378 = vld [vmem:[%s2 + $0x60] sm:$0xff]
        %v379 = vld [vmem:[%s2 + $0x68] sm:$0xf]
        %v380 = vld [vmem:[%s2 + $0x6c] sm:$0xff]
        %v381 = vld [vmem:[%s2 + $0x74] sm:$0xf]
        %v382 = vld [vmem:[%s2 + $0x78] sm:$0xff]
        %v383 = vld [vmem:[%s2 + $0x80] sm:$0xf]
        %v384 = vld [vmem:[%s2 + $0x84] sm:$0xff]
        %v385 = vld [vmem:[%s2 + $0x8c] sm:$0xf]
        %v386 = vld [vmem:[%s2 + $0x90] sm:$0xff]
        %v387 = vld [vmem:[%s2 + $0x98] sm:$0xf]
        %v388 = vld [vmem:[%s2 + $0x9c] sm:$0xff]
        %v389 = vld [vmem:[%s2 + $0xa4] sm:$0xf]
        %v390 = vld [vmem:[%s2 + $0xa8] sm:$0xff]
        %v391 = vld [vmem:[%s2 + $0xb0] sm:$0xf]
        %v392 = vld [vmem:[%s2 + $0xb4] sm:$0xff]
        %v393 = vld [vmem:[%s2 + $0xbc] sm:$0xf]
        %v394 = vld [vmem:[%s2 + $0xc0] sm:$0xff]
        %v395 = vld [vmem:[%s2 + $0xc8] sm:$0xf]
        %v396 = vld [vmem:[%s2 + $0xcc] sm:$0xff]
        %v397 = vld [vmem:[%s2 + $0xd4] sm:$0xf]
        %v398 = vld [vmem:[%s2 + $0xd8] sm:$0xff]
        %v399 = vld [vmem:[%s2 + $0xe0] sm:$0xf]
        %v400 = vld [vmem:[%s2 + $0xe4] sm:$0xff]
        %v401 = vld [vmem:[%s2 + $0xec] sm:$0xf]
        %v402 = vld [vmem:[%s2 + $0xf0] sm:$0xff]
        %v403 = vld [vmem:[%s2 + $0xf8] sm:$0xf]
        %v404 = vld [vmem:[%s2 + $0xfc] sm:$0xff]
        %v405 = vld [vmem:[%s2 + $0x104] sm:$0xf]
        %v406 = vld [vmem:[%s2 + $0x108] sm:$0xff]
        %v407 = vld [vmem:[%s2 + $0x110] sm:$0xf]
        %v408 = vld [vmem:[%s2 + $0x114] sm:$0xff]
        %v409 = vld [vmem:[%s2 + $0x11c] sm:$0xf]
        %v410 = vld [vmem:[%s2 + $0x120] sm:$0xff]
        %v411 = vld [vmem:[%s2 + $0x128] sm:$0xf]
        %v412 = vld [vmem:[%s2 + $0x12c] sm:$0xff]
        %v413 = vld [vmem:[%s2 + $0x134] sm:$0xf]
        %v414 = vld [vmem:[%s2 + $0x138] sm:$0xff]
        %v415 = vld [vmem:[%s2 + $0x140] sm:$0xf]
        %v416 = vld [vmem:[%s2 + $0x144] sm:$0xff]
        %v417 = vld [vmem:[%s2 + $0x14c] sm:$0xf]
        %v418 = vld [vmem:[%s2 + $0x150] sm:$0xff]
        %v419 = vld [vmem:[%s2 + $0x158] sm:$0xf]
        %v420 = vld [vmem:[%s2 + $0x15c] sm:$0xff]
        %v421 = vld [vmem:[%s2 + $0x164] sm:$0xf]
        %v422 = vld [vmem:[%s2 + $0x168] sm:$0xff]
        %v423 = vld [vmem:[%s2 + $0x170] sm:$0xf]
        %v424 = vld [vmem:[%s2 + $0x174] sm:$0xff]
        %v425 = vld [vmem:[%s2 + $0x17c] sm:$0xf]
        %v426 = vld [vmem:[%s2 + $0x180] sm:$0xff]
        %v427 = vld [vmem:[%s2 + $0x188] sm:$0xf]
        %v428 = vld [vmem:[%s2 + $0x18c] sm:$0xff]
        %v429 = vld [vmem:[%s2 + $0x194] sm:$0xf]
        %v430 = vld [vmem:[%s2 + $0x198] sm:$0xff]
        %v431 = vld [vmem:[%s2 + $0x1a0] sm:$0xf]
        %v432 = vld [vmem:[%s2 + $0x1a4] sm:$0xff]
        %v433 = vld [vmem:[%s2 + $0x1ac] sm:$0xf]
        %v434 = vld [vmem:[%s2 + $0x1b0] sm:$0xff]
        %v435 = vld [vmem:[%s2 + $0x1b8] sm:$0xf]
        %v436 = vld [vmem:[%s2 + $0x1bc] sm:$0xff]
        %v437 = vld [vmem:[%s2 + $0x1c4] sm:$0xf]
        %v438 = vld [vmem:[%s2 + $0x1c8] sm:$0xff]
        %v439 = vld [vmem:[%s2 + $0x1d0] sm:$0xf]
        %v440 = vld [vmem:[%s2 + $0x1d4] sm:$0xff]
        %v441 = vld [vmem:[%s2 + $0x1dc] sm:$0xf]
        %v442 = vld [vmem:[%s2 + $0x1e0] sm:$0xff]
        %v443 = vld [vmem:[%s2 + $0x1e8] sm:$0xf]
        %v444 = vld [vmem:[%s2 + $0x1ec] sm:$0xff]
        %v445 = vld [vmem:[%s2 + $0x1f4] sm:$0xf]
        %v446 = vld [vmem:[%s2 + $0x1f8] sm:$0x33]
        %v447 = vld [vmem:[%s2 + $0x200] sm:$0x3]
        %v448 = vld [vmem:[%s3] sm:$0x7]
        %v450 = vlaneseq
        %v451 = vshrl.u32 %v450, 7
        %v452 = vsub.s32 0, %v451
        %v453 = vrot.slane %v448, %v452
        %v454 = vlaneseq
        %v455 = vshrl.u32 %v454, 7
        %v456 = vsub.s32 1, %v455
        %v457 = vrot.slane %v448, %v456
        %v458 = vlaneseq
        %v459 = vshrl.u32 %v458, 7
        %v460 = vsub.s32 2, %v459
        %v461 = vrot.slane %v448, %v460
        %v481 = vunpack.c.l.b16 %v346
        %v482 = vunpack.c.h.b16 %v346
        %v483 = vunpack.c.l.b16 %v347
        %v484 = vunpack.c.l.b16 %v348
        %v485 = vunpack.c.h.b16 %v348
        %v486 = vunpack.c.l.b16 %v349
        %v487 = vunpack.c.l.b16 %v350
        %v488 = vunpack.c.h.b16 %v350
        %v489 = vunpack.c.l.b16 %v351
        %v490 = vunpack.c.l.b16 %v352
        %v491 = vunpack.c.h.b16 %v352
        %v492 = vunpack.c.l.b16 %v353
        %v493 = vunpack.c.l.b16 %v354
        %v494 = vunpack.c.h.b16 %v354
        %v495 = vunpack.c.l.b16 %v355
        %v496 = vunpack.c.l.b16 %v356
        %v497 = vunpack.c.h.b16 %v356
        %v498 = vunpack.c.l.b16 %v357
        %v499 = vunpack.c.l.b16 %v358
        %v500 = vunpack.c.h.b16 %v358
        %v501 = vunpack.c.l.b16 %v359
        %v502 = vunpack.c.l.b16 %v360
        %v503 = vunpack.c.h.b16 %v360
        %v504 = vunpack.c.l.b16 %v361
        %v505 = vpack.c.b16 %v484, %v481
        %v506 = vpack.c.b16 %v485, %v482
        %v507 = vpack.c.b16 %v486, %v483
        %v508 = vpack.c.b16 %v490, %v487
        %v509 = vpack.c.b16 %v491, %v488
        %v510 = vpack.c.b16 %v492, %v489
        %v511 = vpack.c.b16 %v496, %v493
        %v512 = vpack.c.b16 %v497, %v494
        %v513 = vpack.c.b16 %v498, %v495
        %v514 = vpack.c.b16 %v502, %v499
        %v515 = vpack.c.b16 %v503, %v500
        %v516 = vpack.c.b16 %v504, %v501
        %v611 = vunpack.c.l.b16 %v362
        %v612 = vunpack.c.h.b16 %v362
        %v613 = vunpack.c.l.b16 %v363
        %v614 = vunpack.c.l.b16 %v364
        %v615 = vunpack.c.h.b16 %v364
        %v616 = vunpack.c.l.b16 %v365
        %v617 = vunpack.c.l.b16 %v366
        %v618 = vunpack.c.h.b16 %v366
        %v619 = vunpack.c.l.b16 %v367
        %v620 = vunpack.c.l.b16 %v368
        %v621 = vunpack.c.h.b16 %v368
        %v622 = vunpack.c.l.b16 %v369
        %v623 = vunpack.c.l.b16 %v370
        %v624 = vunpack.c.h.b16 %v370
        %v625 = vunpack.c.l.b16 %v371
        %v626 = vunpack.c.l.b16 %v372
        %v627 = vunpack.c.h.b16 %v372
        %v628 = vunpack.c.l.b16 %v373
        %v629 = vunpack.c.l.b16 %v374
        %v630 = vunpack.c.h.b16 %v374
        %v631 = vunpack.c.l.b16 %v375
        %v632 = vunpack.c.l.b16 %v376
        %v633 = vunpack.c.h.b16 %v376
        %v634 = vunpack.c.l.b16 %v377
        %v635 = vunpack.c.l.b16 %v378
        %v636 = vunpack.c.h.b16 %v378
        %v637 = vunpack.c.l.b16 %v379
        %v638 = vunpack.c.l.b16 %v380
        %v639 = vunpack.c.h.b16 %v380
        %v640 = vunpack.c.l.b16 %v381
        %v641 = vunpack.c.l.b16 %v382
        %v642 = vunpack.c.h.b16 %v382
        %v643 = vunpack.c.l.b16 %v383
        %v644 = vunpack.c.l.b16 %v384
        %v645 = vunpack.c.h.b16 %v384
        %v646 = vunpack.c.l.b16 %v385
        %v647 = vunpack.c.l.b16 %v386
        %v648 = vunpack.c.h.b16 %v386
        %v649 = vunpack.c.l.b16 %v387
        %v650 = vunpack.c.l.b16 %v388
        %v651 = vunpack.c.h.b16 %v388
        %v652 = vunpack.c.l.b16 %v389
        %v653 = vunpack.c.l.b16 %v390
        %v654 = vunpack.c.h.b16 %v390
        %v655 = vunpack.c.l.b16 %v391
        %v656 = vunpack.c.l.b16 %v392
        %v657 = vunpack.c.h.b16 %v392
        %v658 = vunpack.c.l.b16 %v393
        %v659 = vunpack.c.l.b16 %v394
        %v660 = vunpack.c.h.b16 %v394
        %v661 = vunpack.c.l.b16 %v395
        %v662 = vunpack.c.l.b16 %v396
        %v663 = vunpack.c.h.b16 %v396
        %v664 = vunpack.c.l.b16 %v397
        %v665 = vunpack.c.l.b16 %v398
        %v666 = vunpack.c.h.b16 %v398
        %v667 = vunpack.c.l.b16 %v399
        %v668 = vunpack.c.l.b16 %v400
        %v669 = vunpack.c.h.b16 %v400
        %v670 = vunpack.c.l.b16 %v401
        %v671 = vunpack.c.l.b16 %v402
        %v672 = vunpack.c.h.b16 %v402
        %v673 = vunpack.c.l.b16 %v403
        %v674 = vunpack.c.l.b16 %v404
        %v675 = vunpack.c.h.b16 %v404
        %v676 = vunpack.c.l.b16 %v405
        %v677 = vunpack.c.l.b16 %v406
        %v678 = vunpack.c.h.b16 %v406
        %v679 = vunpack.c.l.b16 %v407
        %v680 = vunpack.c.l.b16 %v408
        %v681 = vunpack.c.h.b16 %v408
        %v682 = vunpack.c.l.b16 %v409
        %v683 = vunpack.c.l.b16 %v410
        %v684 = vunpack.c.h.b16 %v410
        %v685 = vunpack.c.l.b16 %v411
        %v686 = vunpack.c.l.b16 %v412
        %v687 = vunpack.c.h.b16 %v412
        %v688 = vunpack.c.l.b16 %v413
        %v689 = vunpack.c.l.b16 %v414
        %v690 = vunpack.c.h.b16 %v414
        %v691 = vunpack.c.l.b16 %v415
        %v692 = vunpack.c.l.b16 %v416
        %v693 = vunpack.c.h.b16 %v416
        %v694 = vunpack.c.l.b16 %v417
        %v695 = vunpack.c.l.b16 %v418
        %v696 = vunpack.c.h.b16 %v418
        %v697 = vunpack.c.l.b16 %v419
        %v698 = vunpack.c.l.b16 %v420
        %v699 = vunpack.c.h.b16 %v420
        %v700 = vunpack.c.l.b16 %v421
        %v701 = vunpack.c.l.b16 %v422
        %v702 = vunpack.c.h.b16 %v422
        %v703 = vunpack.c.l.b16 %v423
        %v704 = vunpack.c.l.b16 %v424
        %v705 = vunpack.c.h.b16 %v424
        %v706 = vunpack.c.l.b16 %v425
        %v707 = vunpack.c.l.b16 %v426
        %v708 = vunpack.c.h.b16 %v426
        %v709 = vunpack.c.l.b16 %v427
        %v710 = vunpack.c.l.b16 %v428
        %v711 = vunpack.c.h.b16 %v428
        %v712 = vunpack.c.l.b16 %v429
        %v713 = vunpack.c.l.b16 %v430
        %v714 = vunpack.c.h.b16 %v430
        %v715 = vunpack.c.l.b16 %v431
        %v716 = vunpack.c.l.b16 %v432
        %v717 = vunpack.c.h.b16 %v432
        %v718 = vunpack.c.l.b16 %v433
        %v719 = vunpack.c.l.b16 %v434
        %v720 = vunpack.c.h.b16 %v434
        %v721 = vunpack.c.l.b16 %v435
        %v722 = vunpack.c.l.b16 %v436
        %v723 = vunpack.c.h.b16 %v436
        %v724 = vunpack.c.l.b16 %v437
        %v725 = vunpack.c.l.b16 %v438
        %v726 = vunpack.c.h.b16 %v438
        %v727 = vunpack.c.l.b16 %v439
        %v728 = vunpack.c.l.b16 %v440
        %v729 = vunpack.c.h.b16 %v440
        %v730 = vunpack.c.l.b16 %v441
        %v731 = vunpack.c.l.b16 %v442
        %v732 = vunpack.c.h.b16 %v442
        %v733 = vunpack.c.l.b16 %v443
        %v734 = vunpack.c.l.b16 %v444
        %v735 = vunpack.c.h.b16 %v444
        %v736 = vunpack.c.l.b16 %v445
        %v737 = vunpack.c.l.b16 %v446
        %v738 = vunpack.c.h.b16 %v446
        %v739 = vunpack.c.l.b16 %v447
        %v740 = vpack.c.b16 %v614, %v611
        %v741 = vpack.c.b16 %v615, %v612
        %v742 = vpack.c.b16 %v616, %v613
        %v743 = vpack.c.b16 %v620, %v617
        %v744 = vpack.c.b16 %v621, %v618
        %v745 = vpack.c.b16 %v622, %v619
        %v746 = vpack.c.b16 %v626, %v623
        %v747 = vpack.c.b16 %v627, %v624
        %v748 = vpack.c.b16 %v628, %v625
        %v749 = vpack.c.b16 %v632, %v629
        %v750 = vpack.c.b16 %v633, %v630
        %v751 = vpack.c.b16 %v634, %v631
        %v752 = vpack.c.b16 %v638, %v635
        %v753 = vpack.c.b16 %v639, %v636
        %v754 = vpack.c.b16 %v640, %v637
        %v755 = vpack.c.b16 %v644, %v641
        %v756 = vpack.c.b16 %v645, %v642
        %v757 = vpack.c.b16 %v646, %v643
        %v758 = vpack.c.b16 %v650, %v647
        %v759 = vpack.c.b16 %v651, %v648
        %v760 = vpack.c.b16 %v652, %v649
        %v761 = vpack.c.b16 %v656, %v653
        %v762 = vpack.c.b16 %v657, %v654
        %v763 = vpack.c.b16 %v658, %v655
        %v764 = vpack.c.b16 %v662, %v659
        %v765 = vpack.c.b16 %v663, %v660
        %v766 = vpack.c.b16 %v664, %v661
        %v767 = vpack.c.b16 %v668, %v665
        %v768 = vpack.c.b16 %v669, %v666
        %v769 = vpack.c.b16 %v670, %v667
        %v770 = vpack.c.b16 %v674, %v671
        %v771 = vpack.c.b16 %v675, %v672
        %v772 = vpack.c.b16 %v676, %v673
        %v773 = vpack.c.b16 %v680, %v677
        %v774 = vpack.c.b16 %v681, %v678
        %v775 = vpack.c.b16 %v682, %v679
        %v776 = vpack.c.b16 %v686, %v683
        %v777 = vpack.c.b16 %v687, %v684
        %v778 = vpack.c.b16 %v688, %v685
        %v779 = vpack.c.b16 %v692, %v689
        %v780 = vpack.c.b16 %v693, %v690
        %v781 = vpack.c.b16 %v694, %v691
        %v782 = vpack.c.b16 %v698, %v695
        %v783 = vpack.c.b16 %v699, %v696
        %v784 = vpack.c.b16 %v700, %v697
        %v785 = vpack.c.b16 %v704, %v701
        %v786 = vpack.c.b16 %v705, %v702
        %v787 = vpack.c.b16 %v706, %v703
        %v788 = vpack.c.b16 %v710, %v707
        %v789 = vpack.c.b16 %v711, %v708
        %v790 = vpack.c.b16 %v712, %v709
        %v791 = vpack.c.b16 %v716, %v713
        %v792 = vpack.c.b16 %v717, %v714
        %v793 = vpack.c.b16 %v718, %v715
        %v794 = vpack.c.b16 %v722, %v719
        %v795 = vpack.c.b16 %v723, %v720
        %v796 = vpack.c.b16 %v724, %v721
        %v797 = vpack.c.b16 %v728, %v725
        %v798 = vpack.c.b16 %v729, %v726
        %v799 = vpack.c.b16 %v730, %v727
        %v800 = vpack.c.b16 %v734, %v731
        %v801 = vpack.c.b16 %v735, %v732
        %v802 = vpack.c.b16 %v736, %v733
        %v803 = vpack.c.b16 %v737, %v737
        %v804 = vpack.c.b16 %v738, %v738
        %v805 = vpack.c.b16 %v739, %v739
        %vm869 = vcmask 687104
        %v871 = vsel %vm869, %v507, 0
        %v874 = vsel %vm869, %v510, 0
        %v877 = vsel %vm869, %v513, 0
        %v880 = vsel %vm869, %v516, 0
        %vm882 = vcmask 1041408
        %v884 = vsel %vm882, %v803, 0
        %v887 = vsel %vm882, %v804, 0
        %v890 = vsel %vm882, %v805, 0
        %892 = vmatprep.subr.bf16.mxu0 %v762
        %893 = vmatpush1.bf16.msra.mxu0 %v761
        %894 = vmatprep.subr.bf16.mxu0 %v759
        %895 = vmatpush1.bf16.msra.mxu0 %v758
        %896 = vmatprep.subr.bf16.mxu0 %v756
        %897 = vmatpush1.bf16.msra.mxu0 %v755
        %898 = vmatprep.subr.bf16.mxu0 %v753
        %899 = vmatpush1.bf16.msra.mxu0 %v752
        %900 = vmatprep.subr.bf16.mxu0 %v750
        %901 = vmatpush1.bf16.msra.mxu0 %v749
        %902 = vmatprep.subr.bf16.mxu0 %v747
        %903 = vmatpush1.bf16.msra.mxu0 %v746
        %904 = vmatprep.subr.bf16.mxu0 %v744
        %905 = vmatpush1.bf16.msra.mxu0 %v743
        %906 = vmatprep.subr.bf16.mxu0 %v741
        %907 = vmatpush1.bf16.msra.mxu0 %v740
        %908 = vmatprep.subr.bf16.mxu0 %v786
        %909 = vmatpush2.bf16.msra.mxu0 %v785
        %910 = vmatprep.subr.bf16.mxu0 %v783
        %911 = vmatpush2.bf16.msra.mxu0 %v782
        %912 = vmatprep.subr.bf16.mxu0 %v780
        %913 = vmatpush2.bf16.msra.mxu0 %v779
        %914 = vmatprep.subr.bf16.mxu0 %v777
        %915 = vmatpush2.bf16.msra.mxu0 %v776
        %916 = vmatprep.subr.bf16.mxu0 %v774
        %917 = vmatpush2.bf16.msra.mxu0 %v773
        %918 = vmatprep.subr.bf16.mxu0 %v771
        %919 = vmatpush2.bf16.msra.mxu0 %v770
        %920 = vmatprep.subr.bf16.mxu0 %v768
        %921 = vmatpush2.bf16.msra.mxu0 %v767
        %922 = vmatprep.subr.bf16.mxu0 %v765
        %923 = vmatpush2.bf16.msra.mxu0 %v764
        %924 = vmatprep.mubr.bf16.mxu0 %v506
        %925 = vmatmul.mubr.bf16.gmra.mxu0 %v505
        %v926 = vpop.f32.mrf.mxu0
        %v927 = vadd.f32 %v453, %v926
        %v928 = vpop.f32.mrf.mxu0
        %v929 = vadd.f32 %v457, %v928
        %v930 = vpop.f32.mrf.mxu0
        %v931 = vadd.f32 %v453, %v930
        %v932 = vpop.f32.mrf.mxu0
        %v933 = vadd.f32 %v457, %v932
        %934 = vmatprep.mubr.bf16.mxu0 %v509
        %935 = vmatmul.mubr.bf16.gmra.mxu0 %v508
        %v936 = vpop.f32.mrf.mxu0
        %v937 = vadd.f32 %v453, %v936
        %v938 = vpop.f32.mrf.mxu0
        %v939 = vadd.f32 %v457, %v938
        %v940 = vpop.f32.mrf.mxu0
        %v941 = vadd.f32 %v453, %v940
        %v942 = vpop.f32.mrf.mxu0
        %v943 = vadd.f32 %v457, %v942
        %944 = vmatprep.mubr.bf16.mxu0 %v512
        %945 = vmatmul.mubr.bf16.gmra.mxu0 %v511
        %v946 = vpop.f32.mrf.mxu0
        %v947 = vadd.f32 %v453, %v946
        %v948 = vpop.f32.mrf.mxu0
        %v949 = vadd.f32 %v457, %v948
        %v950 = vpop.f32.mrf.mxu0
        %v951 = vadd.f32 %v453, %v950
        %v952 = vpop.f32.mrf.mxu0
        %v953 = vadd.f32 %v457, %v952
        %954 = vmatprep.mubr.bf16.mxu0 %v515
        %955 = vmatmul.mubr.bf16.gmra.mxu0 %v514
        %v956 = vpop.f32.mrf.mxu0
        %v957 = vadd.f32 %v453, %v956
        %v958 = vpop.f32.mrf.mxu0
        %v959 = vadd.f32 %v457, %v958
        %v960 = vpop.f32.mrf.mxu0
        %v961 = vadd.f32 %v453, %v960
        %v962 = vpop.f32.mrf.mxu0
        %v963 = vadd.f32 %v457, %v962
        %964 = vdwg.mxu0
        %965 = vmatprep.subr.bf16.mxu0 0
        %966 = vmatpush1.bf16.msra.mxu0 0
        %967 = vmatprep.subr.bf16.mxu0 0
        %968 = vmatpush1.bf16.msra.mxu0 0
        %969 = vmatprep.subr.bf16.mxu0 %v887
        %970 = vmatpush1.bf16.msra.mxu0 %v884
        %971 = vmatprep.subr.bf16.mxu0 %v801
        %972 = vmatpush1.bf16.msra.mxu0 %v800
        %973 = vmatprep.subr.bf16.mxu0 %v798
        %974 = vmatpush1.bf16.msra.mxu0 %v797
        %975 = vmatprep.subr.bf16.mxu0 %v795
        %976 = vmatpush1.bf16.msra.mxu0 %v794
        %977 = vmatprep.subr.bf16.mxu0 %v792
        %978 = vmatpush1.bf16.msra.mxu0 %v791
        %979 = vmatprep.subr.bf16.mxu0 %v789
        %980 = vmatpush1.bf16.msra.mxu0 %v788
        %981 = vmatprep.subr.bf16.mxu0 0
        %982 = vmatpush2.bf16.msra.mxu0 0
        %983 = vmatprep.subr.bf16.mxu0 0
        %984 = vmatpush2.bf16.msra.mxu0 0
        %985 = vmatprep.subr.bf16.mxu0 0
        %986 = vmatpush2.bf16.msra.mxu0 0
        %987 = vmatprep.subr.bf16.mxu0 0
        %988 = vmatpush2.bf16.msra.mxu0 0
        %989 = vmatprep.subr.bf16.mxu0 0
        %990 = vmatpush2.bf16.msra.mxu0 0
        %991 = vmatprep.subr.bf16.mxu0 0
        %992 = vmatpush2.bf16.msra.mxu0 0
        %993 = vmatprep.subr.bf16.mxu0 0
        %994 = vmatpush2.bf16.msra.mxu0 0
        %995 = vmatprep.subr.bf16.mxu0 0
        %996 = vmatpush2.bf16.msra.mxu0 0
        %997 = vmatprep.mubr.bf16.mxu0 0
        %998 = vmatmul.mubr.bf16.gmra.mxu0 %v871
        %v999 = vpop.f32.mrf.mxu0
        %v1000 = vadd.f32 %v927, %v999
        %v1001 = vpop.f32.mrf.mxu0
        %v1002 = vadd.f32 %v929, %v1001
        %v1003 = vpop.f32.mrf.mxu0
        %v1004 = vadd.f32 %v931, %v1003
        %v1005 = vpop.f32.mrf.mxu0
        %v1006 = vadd.f32 %v933, %v1005
        %1007 = vmatprep.mubr.bf16.mxu0 0
        %1008 = vmatmul.mubr.bf16.gmra.mxu0 %v874
        %v1009 = vpop.f32.mrf.mxu0
        %v1010 = vadd.f32 %v937, %v1009
        %v1011 = vpop.f32.mrf.mxu0
        %v1012 = vadd.f32 %v939, %v1011
        %v1013 = vpop.f32.mrf.mxu0
        %v1014 = vadd.f32 %v941, %v1013
        %v1015 = vpop.f32.mrf.mxu0
        %v1016 = vadd.f32 %v943, %v1015
        %1017 = vmatprep.mubr.bf16.mxu0 0
        %1018 = vmatmul.mubr.bf16.gmra.mxu0 %v877
        %v1019 = vpop.f32.mrf.mxu0
        %v1020 = vadd.f32 %v947, %v1019
        %v1021 = vpop.f32.mrf.mxu0
        %v1022 = vadd.f32 %v949, %v1021
        %v1023 = vpop.f32.mrf.mxu0
        %v1024 = vadd.f32 %v951, %v1023
        %v1025 = vpop.f32.mrf.mxu0
        %v1026 = vadd.f32 %v953, %v1025
        %1027 = vmatprep.mubr.bf16.mxu0 0
        %1028 = vmatmul.mubr.bf16.gmra.mxu0 %v880
        %v1029 = vpop.f32.mrf.mxu0
        %v1030 = vadd.f32 %v957, %v1029
        %v1031 = vpop.f32.mrf.mxu0
        %v1032 = vadd.f32 %v959, %v1031
        %v1033 = vpop.f32.mrf.mxu0
        %v1034 = vadd.f32 %v961, %v1033
        %v1035 = vpop.f32.mrf.mxu0
        %v1036 = vadd.f32 %v963, %v1035
        %1037 = vdwg.mxu0
        %1038 = vmatprep.subr.bf16.mxu0 0
        %1039 = vmatpush1.bf16.msra.mxu0 %v763
        %1040 = vmatprep.subr.bf16.mxu0 0
        %1041 = vmatpush1.bf16.msra.mxu0 %v760
        %1042 = vmatprep.subr.bf16.mxu0 0
        %1043 = vmatpush1.bf16.msra.mxu0 %v757
        %1044 = vmatprep.subr.bf16.mxu0 0
        %1045 = vmatpush1.bf16.msra.mxu0 %v754
        %1046 = vmatprep.subr.bf16.mxu0 0
        %1047 = vmatpush1.bf16.msra.mxu0 %v751
        %1048 = vmatprep.subr.bf16.mxu0 0
        %1049 = vmatpush1.bf16.msra.mxu0 %v748
        %1050 = vmatprep.subr.bf16.mxu0 0
        %1051 = vmatpush1.bf16.msra.mxu0 %v745
        %1052 = vmatprep.subr.bf16.mxu0 0
        %1053 = vmatpush1.bf16.msra.mxu0 %v742
        %1054 = vmatprep.subr.bf16.mxu0 0
        %1055 = vmatpush2.bf16.msra.mxu0 %v787
        %1056 = vmatprep.subr.bf16.mxu0 0
        %1057 = vmatpush2.bf16.msra.mxu0 %v784
        %1058 = vmatprep.subr.bf16.mxu0 0
        %1059 = vmatpush2.bf16.msra.mxu0 %v781
        %1060 = vmatprep.subr.bf16.mxu0 0
        %1061 = vmatpush2.bf16.msra.mxu0 %v778
        %1062 = vmatprep.subr.bf16.mxu0 0
        %1063 = vmatpush2.bf16.msra.mxu0 %v775
        %1064 = vmatprep.subr.bf16.mxu0 0
        %1065 = vmatpush2.bf16.msra.mxu0 %v772
        %1066 = vmatprep.subr.bf16.mxu0 0
        %1067 = vmatpush2.bf16.msra.mxu0 %v769
        %1068 = vmatprep.subr.bf16.mxu0 0
        %1069 = vmatpush2.bf16.msra.mxu0 %v766
        %1070 = vmatprep.mubr.bf16.mxu0 %v506
        %1071 = vmatmul.mubr.bf16.gmra.mxu0 %v505
        %v1072 = vpop.f32.mrf.mxu0
        %v1073 = vadd.f32 %v461, %v1072
        %v1074 = vpop.f32.mrf.mxu0
        %v1075 = vpop.f32.mrf.mxu0
        %v1076 = vadd.f32 %v461, %v1075
        %v1077 = vpop.f32.mrf.mxu0
        %1078 = vmatprep.mubr.bf16.mxu0 %v509
        %1079 = vmatmul.mubr.bf16.gmra.mxu0 %v508
        %v1080 = vpop.f32.mrf.mxu0
        %v1081 = vadd.f32 %v461, %v1080
        %v1082 = vpop.f32.mrf.mxu0
        %v1083 = vpop.f32.mrf.mxu0
        %v1084 = vadd.f32 %v461, %v1083
        %v1085 = vpop.f32.mrf.mxu0
        %1086 = vmatprep.mubr.bf16.mxu0 %v512
        %1087 = vmatmul.mubr.bf16.gmra.mxu0 %v511
        %v1088 = vpop.f32.mrf.mxu0
        %v1089 = vadd.f32 %v461, %v1088
        %v1090 = vpop.f32.mrf.mxu0
        %v1091 = vpop.f32.mrf.mxu0
        %v1092 = vadd.f32 %v461, %v1091
        %v1093 = vpop.f32.mrf.mxu0
        %1094 = vmatprep.mubr.bf16.mxu0 %v515
        %1095 = vmatmul.mubr.bf16.gmra.mxu0 %v514
        %v1096 = vpop.f32.mrf.mxu0
        %v1097 = vadd.f32 %v461, %v1096
        %v1098 = vpop.f32.mrf.mxu0
        %v1099 = vpop.f32.mrf.mxu0
        %v1100 = vadd.f32 %v461, %v1099
        %v1101 = vpop.f32.mrf.mxu0
        %1102 = vdwg.mxu0
        %1103 = vmatprep.subr.bf16.mxu0 0
        %1104 = vmatpush1.bf16.msra.mxu0 0
        %1105 = vmatprep.subr.bf16.mxu0 0
        %1106 = vmatpush1.bf16.msra.mxu0 0
        %1107 = vmatprep.subr.bf16.mxu0 0
        %1108 = vmatpush1.bf16.msra.mxu0 %v890
        %1109 = vmatprep.subr.bf16.mxu0 0
        %1110 = vmatpush1.bf16.msra.mxu0 %v802
        %1111 = vmatprep.subr.bf16.mxu0 0
        %1112 = vmatpush1.bf16.msra.mxu0 %v799
        %1113 = vmatprep.subr.bf16.mxu0 0
        %1114 = vmatpush1.bf16.msra.mxu0 %v796
        %1115 = vmatprep.subr.bf16.mxu0 0
        %1116 = vmatpush1.bf16.msra.mxu0 %v793
        %1117 = vmatprep.subr.bf16.mxu0 0
        %1118 = vmatpush1.bf16.msra.mxu0 %v790
        %1119 = vmatprep.subr.bf16.mxu0 0
        %1120 = vmatpush2.bf16.msra.mxu0 0
        %1121 = vmatprep.subr.bf16.mxu0 0
        %1122 = vmatpush2.bf16.msra.mxu0 0
        %1123 = vmatprep.subr.bf16.mxu0 0
        %1124 = vmatpush2.bf16.msra.mxu0 0
        %1125 = vmatprep.subr.bf16.mxu0 0
        %1126 = vmatpush2.bf16.msra.mxu0 0
        %1127 = vmatprep.subr.bf16.mxu0 0
        %1128 = vmatpush2.bf16.msra.mxu0 0
        %1129 = vmatprep.subr.bf16.mxu0 0
        %1130 = vmatpush2.bf16.msra.mxu0 0
        %1131 = vmatprep.subr.bf16.mxu0 0
        %1132 = vmatpush2.bf16.msra.mxu0 0
        %1133 = vmatprep.subr.bf16.mxu0 0
        %1134 = vmatpush2.bf16.msra.mxu0 0
        %1135 = vmatprep.mubr.bf16.mxu0 0
        %1136 = vmatmul.mubr.bf16.gmra.mxu0 %v871
        %v1137 = vpop.f32.mrf.mxu0
        %v1138 = vadd.f32 %v1073, %v1137
        %v1139 = vpop.f32.mrf.mxu0
        %v1140 = vpop.f32.mrf.mxu0
        %v1141 = vadd.f32 %v1076, %v1140
        %v1142 = vpop.f32.mrf.mxu0
        %1143 = vmatprep.mubr.bf16.mxu0 0
        %1144 = vmatmul.mubr.bf16.gmra.mxu0 %v874
        %v1145 = vpop.f32.mrf.mxu0
        %v1146 = vadd.f32 %v1081, %v1145
        %v1147 = vpop.f32.mrf.mxu0
        %v1148 = vpop.f32.mrf.mxu0
        %v1149 = vadd.f32 %v1084, %v1148
        %v1150 = vpop.f32.mrf.mxu0
        %1151 = vmatprep.mubr.bf16.mxu0 0
        %1152 = vmatmul.mubr.bf16.gmra.mxu0 %v877
        %v1153 = vpop.f32.mrf.mxu0
        %v1154 = vadd.f32 %v1089, %v1153
        %v1155 = vpop.f32.mrf.mxu0
        %v1156 = vpop.f32.mrf.mxu0
        %v1157 = vadd.f32 %v1092, %v1156
        %v1158 = vpop.f32.mrf.mxu0
        %1159 = vmatprep.mubr.bf16.mxu0 0
        %1160 = vmatmul.mubr.bf16.gmra.mxu0 %v880
        %v1161 = vpop.f32.mrf.mxu0
        %v1162 = vadd.f32 %v1097, %v1161
        %v1163 = vpop.f32.mrf.mxu0
        %v1164 = vpop.f32.mrf.mxu0
        %v1165 = vadd.f32 %v1100, %v1164
        %v1166 = vpop.f32.mrf.mxu0
        %1167 = vdwg.mxu0
        %v1168 = vmul.f32 %v1000, %v1000
        %v1169 = vmul.f32 %v1002, %v1002
        %v1170 = vmul.f32 %v1138, %v1138
        %v1171 = vmul.f32 %v1004, %v1004
        %v1172 = vmul.f32 %v1006, %v1006
        %v1173 = vmul.f32 %v1141, %v1141
        %v1174 = vmul.f32 %v1010, %v1010
        %v1175 = vmul.f32 %v1012, %v1012
        %v1176 = vmul.f32 %v1146, %v1146
        %v1177 = vmul.f32 %v1014, %v1014
        %v1178 = vmul.f32 %v1016, %v1016
        %v1179 = vmul.f32 %v1149, %v1149
        %v1180 = vmul.f32 %v1020, %v1020
        %v1181 = vmul.f32 %v1022, %v1022
        %v1182 = vmul.f32 %v1154, %v1154
        %v1183 = vmul.f32 %v1024, %v1024
        %v1184 = vmul.f32 %v1026, %v1026
        %v1185 = vmul.f32 %v1157, %v1157
        %v1186 = vmul.f32 %v1030, %v1030
        %v1187 = vmul.f32 %v1032, %v1032
        %v1188 = vmul.f32 %v1162, %v1162
        %v1189 = vmul.f32 %v1034, %v1034
        %v1190 = vmul.f32 %v1036, %v1036
        %v1191 = vmul.f32 %v1165, %v1165
        %v1192 = vld [vmem:[%s4] sm:$0xff]
        %v1193 = vld [vmem:[%s4 + $0x8] sm:$0xff]
        %v1194 = vld [vmem:[%s4 + $0x10] sm:$0xff]
        %v1195 = vld [vmem:[%s4 + $0x18] sm:$0xff]
        %v1196 = vld [vmem:[%s4 + $0x20] sm:$0xff]
        %v1197 = vld [vmem:[%s4 + $0x28] sm:$0xff]
        %v1198 = vld [vmem:[%s4 + $0x30] sm:$0xff]
        %v1199 = vld [vmem:[%s4 + $0x38] sm:$0xff]
        %v1200 = vld [vmem:[%s4 + $0x40] sm:$0xff]
        %v1201 = vld [vmem:[%s4 + $0x48] sm:$0xff]
        %v1202 = vld [vmem:[%s4 + $0x50] sm:$0xff]
        %v1203 = vld [vmem:[%s4 + $0x58] sm:$0xff]
        %v1204 = vld [vmem:[%s4 + $0x60] sm:$0xff]
        %v1205 = vld [vmem:[%s4 + $0x68] sm:$0xff]
        %v1206 = vld [vmem:[%s4 + $0x70] sm:$0xff]
        %v1207 = vld [vmem:[%s4 + $0x78] sm:$0xff]
        %v1208 = vld [vmem:[%s4 + $0x80] sm:$0xff]
        %v1209 = vld [vmem:[%s4 + $0x88] sm:$0xff]
        %v1210 = vld [vmem:[%s4 + $0x90] sm:$0xff]
        %v1211 = vld [vmem:[%s4 + $0x98] sm:$0xff]
        %v1212 = vld [vmem:[%s4 + $0xa0] sm:$0xff]
        %v1213 = vld [vmem:[%s4 + $0xa8] sm:$0xff]
        %v1214 = vld [vmem:[%s4 + $0xb0] sm:$0xff]
        %v1215 = vld [vmem:[%s4 + $0xb8] sm:$0xff]
        %v1216 = vld [vmem:[%s4 + $0xc0] sm:$0xff]
        %v1217 = vld [vmem:[%s4 + $0xc8] sm:$0xff]
        %v1218 = vld [vmem:[%s4 + $0xd0] sm:$0xff]
        %v1219 = vld [vmem:[%s4 + $0xd8] sm:$0xff]
        %v1220 = vld [vmem:[%s4 + $0xe0] sm:$0xff]
        %v1221 = vld [vmem:[%s4 + $0xe8] sm:$0xff]
        %v1222 = vld [vmem:[%s4 + $0xf0] sm:$0xff]
        %v1223 = vld [vmem:[%s4 + $0xf8] sm:$0xff]
        %v1224 = vld [vmem:[%s4 + $0x100] sm:$0xff]
        %v1225 = vld [vmem:[%s4 + $0x108] sm:$0xff]
        %vm1226 = vcmask 130048
        %v1228 = vsel %vm1226, %v1170, 0
        %v1231 = vsel %vm1226, %v1173, 0
        %v1234 = vsel %vm1226, %v1176, 0
        %v1237 = vsel %vm1226, %v1179, 0
        %v1240 = vsel %vm1226, %v1182, 0
        %v1243 = vsel %vm1226, %v1185, 0
        %v1246 = vsel %vm1226, %v1188, 0
        %v1249 = vsel %vm1226, %v1191, 0
        %1251 = vmatprep.subr.mxu0 0.0
        %1252 = vmatpush1.msra.mxu0 %v1207
        %1253 = vmatprep.subr.mxu0 0.0
        %1254 = vmatpush1.msra.mxu0 %v1206
        %1255 = vmatprep.subr.mxu0 0.0
        %1256 = vmatpush1.msra.mxu0 %v1205
        %1257 = vmatprep.subr.mxu0 0.0
        %1258 = vmatpush1.msra.mxu0 %v1204
        %1259 = vmatprep.subr.mxu0 0.0
        %1260 = vmatpush1.msra.mxu0 %v1203
        %1261 = vmatprep.subr.mxu0 0.0
        %1262 = vmatpush1.msra.mxu0 %v1202
        %1263 = vmatprep.subr.mxu0 0.0
        %1264 = vmatpush1.msra.mxu0 %v1201
        %1265 = vmatprep.subr.mxu0 0.0
        %1266 = vmatpush1.msra.mxu0 %v1200
        %1267 = vmatprep.subr.mxu0 0.0
        %1268 = vmatpush1.msra.mxu0 %v1199
        %1269 = vmatprep.subr.mxu0 0.0
        %1270 = vmatpush1.msra.mxu0 %v1198
        %1271 = vmatprep.subr.mxu0 0.0
        %1272 = vmatpush1.msra.mxu0 %v1197
        %1273 = vmatprep.subr.mxu0 0.0
        %1274 = vmatpush1.msra.mxu0 %v1196
        %1275 = vmatprep.subr.mxu0 0.0
        %1276 = vmatpush1.msra.mxu0 %v1195
        %1277 = vmatprep.subr.mxu0 0.0
        %1278 = vmatpush1.msra.mxu0 %v1194
        %1279 = vmatprep.subr.mxu0 0.0
        %1280 = vmatpush1.msra.mxu0 %v1193
        %1281 = vmatprep.subr.mxu0 0.0
        %1282 = vmatpush1.msra.mxu0 %v1192
        %1283 = vmatprep.subr.mxu0 0.0
        %1284 = vmatpush2.msra.mxu0 %v1223
        %1285 = vmatprep.subr.mxu0 0.0
        %1286 = vmatpush2.msra.mxu0 %v1222
        %1287 = vmatprep.subr.mxu0 0.0
        %1288 = vmatpush2.msra.mxu0 %v1221
        %1289 = vmatprep.subr.mxu0 0.0
        %1290 = vmatpush2.msra.mxu0 %v1220
        %1291 = vmatprep.subr.mxu0 0.0
        %1292 = vmatpush2.msra.mxu0 %v1219
        %1293 = vmatprep.subr.mxu0 0.0
        %1294 = vmatpush2.msra.mxu0 %v1218
        %1295 = vmatprep.subr.mxu0 0.0
        %1296 = vmatpush2.msra.mxu0 %v1217
        %1297 = vmatprep.subr.mxu0 0.0
        %1298 = vmatpush2.msra.mxu0 %v1216
        %1299 = vmatprep.subr.mxu0 0.0
        %1300 = vmatpush2.msra.mxu0 %v1215
        %1301 = vmatprep.subr.mxu0 0.0
        %1302 = vmatpush2.msra.mxu0 %v1214
        %1303 = vmatprep.subr.mxu0 0.0
        %1304 = vmatpush2.msra.mxu0 %v1213
        %1305 = vmatprep.subr.mxu0 0.0
        %1306 = vmatpush2.msra.mxu0 %v1212
        %1307 = vmatprep.subr.mxu0 0.0
        %1308 = vmatpush2.msra.mxu0 %v1211
        %1309 = vmatprep.subr.mxu0 0.0
        %1310 = vmatpush2.msra.mxu0 %v1210
        %1311 = vmatprep.subr.mxu0 0.0
        %1312 = vmatpush2.msra.mxu0 %v1209
        %1313 = vmatprep.subr.mxu0 0.0
        %1314 = vmatpush2.msra.mxu0 %v1208
        %1315 = vmatprep.mubr.f32.mxu0 %v1169
        %1316 = vmatmul.mubr.f32.gmra.mxu0 %v1168
        %v1317 = vpop.f32.mrf.mxu0
        %v1318 = vadd.f32 0.0, %v1317
        %v1319 = vpop.f32.mrf.mxu0
        %1320 = vmatprep.mubr.f32.mxu0 %v1172
        %1321 = vmatmul.mubr.f32.gmra.mxu0 %v1171
        %v1322 = vpop.f32.mrf.mxu0
        %v1323 = vadd.f32 0.0, %v1322
        %v1324 = vpop.f32.mrf.mxu0
        %1325 = vmatprep.mubr.f32.mxu0 %v1175
        %1326 = vmatmul.mubr.f32.gmra.mxu0 %v1174
        %v1327 = vpop.f32.mrf.mxu0
        %v1328 = vadd.f32 0.0, %v1327
        %v1329 = vpop.f32.mrf.mxu0
        %1330 = vmatprep.mubr.f32.mxu0 %v1178
        %1331 = vmatmul.mubr.f32.gmra.mxu0 %v1177
        %v1332 = vpop.f32.mrf.mxu0
        %v1333 = vadd.f32 0.0, %v1332
        %v1334 = vpop.f32.mrf.mxu0
        %1335 = vmatprep.mubr.f32.mxu0 %v1181
        %1336 = vmatmul.mubr.f32.gmra.mxu0 %v1180
        %v1337 = vpop.f32.mrf.mxu0
        %v1338 = vadd.f32 0.0, %v1337
        %v1339 = vpop.f32.mrf.mxu0
        %1340 = vmatprep.mubr.f32.mxu0 %v1184
        %1341 = vmatmul.mubr.f32.gmra.mxu0 %v1183
        %v1342 = vpop.f32.mrf.mxu0
        %v1343 = vadd.f32 0.0, %v1342
        %v1344 = vpop.f32.mrf.mxu0
        %1345 = vmatprep.mubr.f32.mxu0 %v1187
        %1346 = vmatmul.mubr.f32.gmra.mxu0 %v1186
        %v1347 = vpop.f32.mrf.mxu0
        %v1348 = vadd.f32 0.0, %v1347
        %v1349 = vpop.f32.mrf.mxu0
        %1350 = vmatprep.mubr.f32.mxu0 %v1190
        %1351 = vmatmul.mubr.f32.gmra.mxu0 %v1189
        %v1352 = vpop.f32.mrf.mxu0
        %v1353 = vadd.f32 0.0, %v1352
        %v1354 = vpop.f32.mrf.mxu0
        %1355 = vdwg.mxu0
        %1356 = vmatprep.subr.mxu0 0.0
        %1357 = vmatpush1.msra.mxu0 0.0
        %1358 = vmatprep.subr.mxu0 0.0
        %1359 = vmatpush1.msra.mxu0 0.0
        %1360 = vmatprep.subr.mxu0 0.0
        %1361 = vmatpush1.msra.mxu0 0.0
        %1362 = vmatprep.subr.mxu0 0.0
        %1363 = vmatpush1.msra.mxu0 0.0
        %1364 = vmatprep.subr.mxu0 0.0
        %1365 = vmatpush1.msra.mxu0 0.0
        %1366 = vmatprep.subr.mxu0 0.0
        %1367 = vmatpush1.msra.mxu0 0.0
        %1368 = vmatprep.subr.mxu0 0.0
        %1369 = vmatpush1.msra.mxu0 0.0
        %1370 = vmatprep.subr.mxu0 0.0
        %1371 = vmatpush1.msra.mxu0 0.0
        %1372 = vmatprep.subr.mxu0 0.0
        %1373 = vmatpush1.msra.mxu0 0.0
        %1374 = vmatprep.subr.mxu0 0.0
        %1375 = vmatpush1.msra.mxu0 0.0
        %1376 = vmatprep.subr.mxu0 0.0
        %1377 = vmatpush1.msra.mxu0 0.0
        %1378 = vmatprep.subr.mxu0 0.0
        %1379 = vmatpush1.msra.mxu0 0.0
        %1380 = vmatprep.subr.mxu0 0.0
        %1381 = vmatpush1.msra.mxu0 0.0
        %1382 = vmatprep.subr.mxu0 0.0
        %1383 = vmatpush1.msra.mxu0 0.0
        %1384 = vmatprep.subr.mxu0 0.0
        %1385 = vmatpush1.msra.mxu0 %v1225
        %1386 = vmatprep.subr.mxu0 0.0
        %1387 = vmatpush1.msra.mxu0 %v1224
        %1388 = vmatprep.subr.mxu0 0.0
        %1389 = vmatpush2.msra.mxu0 0.0
        %1390 = vmatprep.subr.mxu0 0.0
        %1391 = vmatpush2.msra.mxu0 0.0
        %1392 = vmatprep.subr.mxu0 0.0
        %1393 = vmatpush2.msra.mxu0 0.0
        %1394 = vmatprep.subr.mxu0 0.0
        %1395 = vmatpush2.msra.mxu0 0.0
        %1396 = vmatprep.subr.mxu0 0.0
        %1397 = vmatpush2.msra.mxu0 0.0
        %1398 = vmatprep.subr.mxu0 0.0
        %1399 = vmatpush2.msra.mxu0 0.0
        %1400 = vmatprep.subr.mxu0 0.0
        %1401 = vmatpush2.msra.mxu0 0.0
        %1402 = vmatprep.subr.mxu0 0.0
        %1403 = vmatpush2.msra.mxu0 0.0
        %1404 = vmatprep.subr.mxu0 0.0
        %1405 = vmatpush2.msra.mxu0 0.0
        %1406 = vmatprep.subr.mxu0 0.0
        %1407 = vmatpush2.msra.mxu0 0.0
        %1408 = vmatprep.subr.mxu0 0.0
        %1409 = vmatpush2.msra.mxu0 0.0
        %1410 = vmatprep.subr.mxu0 0.0
        %1411 = vmatpush2.msra.mxu0 0.0
        %1412 = vmatprep.subr.mxu0 0.0
        %1413 = vmatpush2.msra.mxu0 0.0
        %1414 = vmatprep.subr.mxu0 0.0
        %1415 = vmatpush2.msra.mxu0 0.0
        %1416 = vmatprep.subr.mxu0 0.0
        %1417 = vmatpush2.msra.mxu0 0.0
        %1418 = vmatprep.subr.mxu0 0.0
        %1419 = vmatpush2.msra.mxu0 0.0
        %1420 = vmatprep.mubr.f32.mxu0 0.0
        %1421 = vmatmul.mubr.f32.gmra.mxu0 %v1228
        %v1422 = vpop.f32.mrf.mxu0
        %v1423 = vadd.f32 %v1318, %v1422
        %v1424 = vpop.f32.mrf.mxu0
        %1425 = vmatprep.mubr.f32.mxu0 0.0
        %1426 = vmatmul.mubr.f32.gmra.mxu0 %v1231
        %v1427 = vpop.f32.mrf.mxu0
        %v1428 = vadd.f32 %v1323, %v1427
        %v1429 = vpop.f32.mrf.mxu0
        %1430 = vmatprep.mubr.f32.mxu0 0.0
        %1431 = vmatmul.mubr.f32.gmra.mxu0 %v1234
        %v1432 = vpop.f32.mrf.mxu0
        %v1433 = vadd.f32 %v1328, %v1432
        %v1434 = vpop.f32.mrf.mxu0
        %1435 = vmatprep.mubr.f32.mxu0 0.0
        %1436 = vmatmul.mubr.f32.gmra.mxu0 %v1237
        %v1437 = vpop.f32.mrf.mxu0
        %v1438 = vadd.f32 %v1333, %v1437
        %v1439 = vpop.f32.mrf.mxu0
        %1440 = vmatprep.mubr.f32.mxu0 0.0
        %1441 = vmatmul.mubr.f32.gmra.mxu0 %v1240
        %v1442 = vpop.f32.mrf.mxu0
        %v1443 = vadd.f32 %v1338, %v1442
        %v1444 = vpop.f32.mrf.mxu0
        %1445 = vmatprep.mubr.f32.mxu0 0.0
        %1446 = vmatmul.mubr.f32.gmra.mxu0 %v1243
        %v1447 = vpop.f32.mrf.mxu0
        %v1448 = vadd.f32 %v1343, %v1447
        %v1449 = vpop.f32.mrf.mxu0
        %1450 = vmatprep.mubr.f32.mxu0 0.0
        %1451 = vmatmul.mubr.f32.gmra.mxu0 %v1246
        %v1452 = vpop.f32.mrf.mxu0
        %v1453 = vadd.f32 %v1348, %v1452
        %v1454 = vpop.f32.mrf.mxu0
        %1455 = vmatprep.mubr.f32.mxu0 0.0
        %1456 = vmatmul.mubr.f32.gmra.mxu0 %v1249
        %v1457 = vpop.f32.mrf.mxu0
        %v1458 = vadd.f32 %v1353, %v1457
        %v1459 = vpop.f32.mrf.mxu0
        %1460 = vdwg.mxu0
        %1461 = vrot.lane.b32.xlu0 %v1170, 92
        %v1462 = vpop.permute.xlu0 %1461
        %1463 = vrot.lane.b32.xlu0 %v1173, 92
        %v1464 = vpop.permute.xlu0 %1463
        %1465 = vrot.lane.b32.xlu0 %v1176, 92
        %v1466 = vpop.permute.xlu0 %1465
        %1467 = vrot.lane.b32.xlu0 %v1179, 92
        %v1468 = vpop.permute.xlu0 %1467
        %1469 = vrot.lane.b32.xlu0 %v1182, 92
        %v1470 = vpop.permute.xlu0 %1469
        %1471 = vrot.lane.b32.xlu0 %v1185, 92
        %v1472 = vpop.permute.xlu0 %1471
        %1473 = vrot.lane.b32.xlu0 %v1188, 92
        %v1474 = vpop.permute.xlu0 %1473
        %1475 = vrot.lane.b32.xlu0 %v1191, 92
        %v1476 = vpop.permute.xlu0 %1475
        %v1485 = vsub.f32 %v1423, %v1462
        %v1486 = vsub.f32 %v1428, %v1464
        %v1487 = vsub.f32 %v1433, %v1466
        %v1488 = vsub.f32 %v1438, %v1468
        %v1489 = vsub.f32 %v1443, %v1470
        %v1490 = vsub.f32 %v1448, %v1472
        %v1491 = vsub.f32 %v1453, %v1474
        %v1492 = vsub.f32 %v1458, %v1476
        %v1493 = vmax.f32 %v1000, %v1002
        %v1494 = vmax.f32 %v1004, %v1006
        %v1495 = vmax.f32 %v1010, %v1012
        %v1496 = vmax.f32 %v1014, %v1016
        %v1497 = vmax.f32 %v1020, %v1022
        %v1498 = vmax.f32 %v1024, %v1026
        %v1499 = vmax.f32 %v1030, %v1032
        %v1500 = vmax.f32 %v1034, %v1036
        %1509 = vrot.lane.b32.xlu0 %v1493, 64
        %v1510 = vpop.permute.xlu0 %1509
        %1511 = vrot.lane.b32.xlu0 %v1494, 64
        %v1512 = vpop.permute.xlu0 %1511
        %1513 = vrot.lane.b32.xlu0 %v1495, 64
        %v1514 = vpop.permute.xlu0 %1513
        %1515 = vrot.lane.b32.xlu0 %v1496, 64
        %v1516 = vpop.permute.xlu0 %1515
        %1517 = vrot.lane.b32.xlu0 %v1497, 64
        %v1518 = vpop.permute.xlu0 %1517
        %1519 = vrot.lane.b32.xlu0 %v1498, 64
        %v1520 = vpop.permute.xlu0 %1519
        %1521 = vrot.lane.b32.xlu0 %v1499, 64
        %v1522 = vpop.permute.xlu0 %1521
        %1523 = vrot.lane.b32.xlu0 %v1500, 64
        %v1524 = vpop.permute.xlu0 %1523
        %v1533 = vmax.f32 %v1493, %v1510
        %v1534 = vmax.f32 %v1494, %v1512
        %v1535 = vmax.f32 %v1495, %v1514
        %v1536 = vmax.f32 %v1496, %v1516
        %v1537 = vmax.f32 %v1497, %v1518
        %v1538 = vmax.f32 %v1498, %v1520
        %v1539 = vmax.f32 %v1499, %v1522
        %v1540 = vmax.f32 %v1500, %v1524
        %1549 = vrot.lane.b32.xlu0 %v1533, 96
        %v1550 = vpop.permute.xlu0 %1549
        %1551 = vrot.lane.b32.xlu0 %v1534, 96
        %v1552 = vpop.permute.xlu0 %1551
        %1553 = vrot.lane.b32.xlu0 %v1535, 96
        %v1554 = vpop.permute.xlu0 %1553
        %1555 = vrot.lane.b32.xlu0 %v1536, 96
        %v1556 = vpop.permute.xlu0 %1555
        %1557 = vrot.lane.b32.xlu0 %v1537, 96
        %v1558 = vpop.permute.xlu0 %1557
        %1559 = vrot.lane.b32.xlu0 %v1538, 96
        %v1560 = vpop.permute.xlu0 %1559
        %1561 = vrot.lane.b32.xlu0 %v1539, 96
        %v1562 = vpop.permute.xlu0 %1561
        %1563 = vrot.lane.b32.xlu0 %v1540, 96
        %v1564 = vpop.permute.xlu0 %1563
        %v1573 = vmax.f32 %v1533, %v1550
        %v1574 = vmax.f32 %v1534, %v1552
        %v1575 = vmax.f32 %v1535, %v1554
        %v1576 = vmax.f32 %v1536, %v1556
        %v1577 = vmax.f32 %v1537, %v1558
        %v1578 = vmax.f32 %v1538, %v1560
        %v1579 = vmax.f32 %v1539, %v1562
        %v1580 = vmax.f32 %v1540, %v1564
        %1589 = vrot.lane.b32.xlu0 %v1573, 112
        %v1590 = vpop.permute.xlu0 %1589
        %1591 = vrot.lane.b32.xlu0 %v1574, 112
        %v1592 = vpop.permute.xlu0 %1591
        %1593 = vrot.lane.b32.xlu0 %v1575, 112
        %v1594 = vpop.permute.xlu0 %1593
        %1595 = vrot.lane.b32.xlu0 %v1576, 112
        %v1596 = vpop.permute.xlu0 %1595
        %1597 = vrot.lane.b32.xlu0 %v1577, 112
        %v1598 = vpop.permute.xlu0 %1597
        %1599 = vrot.lane.b32.xlu0 %v1578, 112
        %v1600 = vpop.permute.xlu0 %1599
        %1601 = vrot.lane.b32.xlu0 %v1579, 112
        %v1602 = vpop.permute.xlu0 %1601
        %1603 = vrot.lane.b32.xlu0 %v1580, 112
        %v1604 = vpop.permute.xlu0 %1603
        %v1613 = vmax.f32 %v1573, %v1590
        %v1614 = vmax.f32 %v1574, %v1592
        %v1615 = vmax.f32 %v1575, %v1594
        %v1616 = vmax.f32 %v1576, %v1596
        %v1617 = vmax.f32 %v1577, %v1598
        %v1618 = vmax.f32 %v1578, %v1600
        %v1619 = vmax.f32 %v1579, %v1602
        %v1620 = vmax.f32 %v1580, %v1604
        %v1621 = vmin.f32 %v1000, %v1002
        %v1622 = vmin.f32 %v1004, %v1006
        %v1623 = vmin.f32 %v1010, %v1012
        %v1624 = vmin.f32 %v1014, %v1016
        %v1625 = vmin.f32 %v1020, %v1022
        %v1626 = vmin.f32 %v1024, %v1026
        %v1627 = vmin.f32 %v1030, %v1032
        %v1628 = vmin.f32 %v1034, %v1036
        %1637 = vrot.lane.b32.xlu0 %v1621, 64
        %v1638 = vpop.permute.xlu0 %1637
        %1639 = vrot.lane.b32.xlu0 %v1622, 64
        %v1640 = vpop.permute.xlu0 %1639
        %1641 = vrot.lane.b32.xlu0 %v1623, 64
        %v1642 = vpop.permute.xlu0 %1641
        %1643 = vrot.lane.b32.xlu0 %v1624, 64
        %v1644 = vpop.permute.xlu0 %1643
        %1645 = vrot.lane.b32.xlu0 %v1625, 64
        %v1646 = vpop.permute.xlu0 %1645
        %1647 = vrot.lane.b32.xlu0 %v1626, 64
        %v1648 = vpop.permute.xlu0 %1647
        %1649 = vrot.lane.b32.xlu0 %v1627, 64
        %v1650 = vpop.permute.xlu0 %1649
        %1651 = vrot.lane.b32.xlu0 %v1628, 64
        %v1652 = vpop.permute.xlu0 %1651
        %v1661 = vmin.f32 %v1621, %v1638
        %v1662 = vmin.f32 %v1622, %v1640
        %v1663 = vmin.f32 %v1623, %v1642
        %v1664 = vmin.f32 %v1624, %v1644
        %v1665 = vmin.f32 %v1625, %v1646
        %v1666 = vmin.f32 %v1626, %v1648
        %v1667 = vmin.f32 %v1627, %v1650
        %v1668 = vmin.f32 %v1628, %v1652
        %1677 = vrot.lane.b32.xlu0 %v1661, 96
        %v1678 = vpop.permute.xlu0 %1677
        %1679 = vrot.lane.b32.xlu0 %v1662, 96
        %v1680 = vpop.permute.xlu0 %1679
        %1681 = vrot.lane.b32.xlu0 %v1663, 96
        %v1682 = vpop.permute.xlu0 %1681
        %1683 = vrot.lane.b32.xlu0 %v1664, 96
        %v1684 = vpop.permute.xlu0 %1683
        %1685 = vrot.lane.b32.xlu0 %v1665, 96
        %v1686 = vpop.permute.xlu0 %1685
        %1687 = vrot.lane.b32.xlu0 %v1666, 96
        %v1688 = vpop.permute.xlu0 %1687
        %1689 = vrot.lane.b32.xlu0 %v1667, 96
        %v1690 = vpop.permute.xlu0 %1689
        %1691 = vrot.lane.b32.xlu0 %v1668, 96
        %v1692 = vpop.permute.xlu0 %1691
        %v1701 = vmin.f32 %v1661, %v1678
        %v1702 = vmin.f32 %v1662, %v1680
        %v1703 = vmin.f32 %v1663, %v1682
        %v1704 = vmin.f32 %v1664, %v1684
        %v1705 = vmin.f32 %v1665, %v1686
        %v1706 = vmin.f32 %v1666, %v1688
        %v1707 = vmin.f32 %v1667, %v1690
        %v1708 = vmin.f32 %v1668, %v1692
        %1717 = vrot.lane.b32.xlu0 %v1701, 112
        %v1718 = vpop.permute.xlu0 %1717
        %1719 = vrot.lane.b32.xlu0 %v1702, 112
        %v1720 = vpop.permute.xlu0 %1719
        %1721 = vrot.lane.b32.xlu0 %v1703, 112
        %v1722 = vpop.permute.xlu0 %1721
        %1723 = vrot.lane.b32.xlu0 %v1704, 112
        %v1724 = vpop.permute.xlu0 %1723
        %1725 = vrot.lane.b32.xlu0 %v1705, 112
        %v1726 = vpop.permute.xlu0 %1725
        %1727 = vrot.lane.b32.xlu0 %v1706, 112
        %v1728 = vpop.permute.xlu0 %1727
        %1729 = vrot.lane.b32.xlu0 %v1707, 112
        %v1730 = vpop.permute.xlu0 %1729
        %1731 = vrot.lane.b32.xlu0 %v1708, 112
        %v1732 = vpop.permute.xlu0 %1731
        %v1741 = vmin.f32 %v1701, %v1718
        %v1742 = vmin.f32 %v1702, %v1720
        %v1743 = vmin.f32 %v1703, %v1722
        %v1744 = vmin.f32 %v1704, %v1724
        %v1745 = vmin.f32 %v1705, %v1726
        %v1746 = vmin.f32 %v1706, %v1728
        %v1747 = vmin.f32 %v1707, %v1730
        %v1748 = vmin.f32 %v1708, %v1732
        %1757 = vrot.lane.b32.xlu0 %v1138, 120
        %v1758 = vpop.permute.xlu0 %1757
        %1759 = vrot.lane.b32.xlu0 %v1141, 120
        %v1760 = vpop.permute.xlu0 %1759
        %1761 = vrot.lane.b32.xlu0 %v1146, 120
        %v1762 = vpop.permute.xlu0 %1761
        %1763 = vrot.lane.b32.xlu0 %v1149, 120
        %v1764 = vpop.permute.xlu0 %1763
        %1765 = vrot.lane.b32.xlu0 %v1154, 120
        %v1766 = vpop.permute.xlu0 %1765
        %1767 = vrot.lane.b32.xlu0 %v1157, 120
        %v1768 = vpop.permute.xlu0 %1767
        %1769 = vrot.lane.b32.xlu0 %v1162, 120
        %v1770 = vpop.permute.xlu0 %1769
        %1771 = vrot.lane.b32.xlu0 %v1165, 120
        %v1772 = vpop.permute.xlu0 %1771
        %v1781 = vmax.f32 %v1138, %v1758
        %v1782 = vmax.f32 %v1141, %v1760
        %v1783 = vmax.f32 %v1146, %v1762
        %v1784 = vmax.f32 %v1149, %v1764
        %v1785 = vmax.f32 %v1154, %v1766
        %v1786 = vmax.f32 %v1157, %v1768
        %v1787 = vmax.f32 %v1162, %v1770
        %v1788 = vmax.f32 %v1165, %v1772
        %1797 = vrot.lane.b32.xlu0 %v1781, 124
        %v1798 = vpop.permute.xlu0 %1797
        %1799 = vrot.lane.b32.xlu0 %v1782, 124
        %v1800 = vpop.permute.xlu0 %1799
        %1801 = vrot.lane.b32.xlu0 %v1783, 124
        %v1802 = vpop.permute.xlu0 %1801
        %1803 = vrot.lane.b32.xlu0 %v1784, 124
        %v1804 = vpop.permute.xlu0 %1803
        %1805 = vrot.lane.b32.xlu0 %v1785, 124
        %v1806 = vpop.permute.xlu0 %1805
        %1807 = vrot.lane.b32.xlu0 %v1786, 124
        %v1808 = vpop.permute.xlu0 %1807
        %1809 = vrot.lane.b32.xlu0 %v1787, 124
        %v1810 = vpop.permute.xlu0 %1809
        %1811 = vrot.lane.b32.xlu0 %v1788, 124
        %v1812 = vpop.permute.xlu0 %1811
        %v1821 = vmax.f32 %v1781, %v1798
        %v1822 = vmax.f32 %v1782, %v1800
        %v1823 = vmax.f32 %v1783, %v1802
        %v1824 = vmax.f32 %v1784, %v1804
        %v1825 = vmax.f32 %v1785, %v1806
        %v1826 = vmax.f32 %v1786, %v1808
        %v1827 = vmax.f32 %v1787, %v1810
        %v1828 = vmax.f32 %v1788, %v1812
        %v1829 = vmin.f32 %v1138, %v1758
        %v1830 = vmin.f32 %v1141, %v1760
        %v1831 = vmin.f32 %v1146, %v1762
        %v1832 = vmin.f32 %v1149, %v1764
        %v1833 = vmin.f32 %v1154, %v1766
        %v1834 = vmin.f32 %v1157, %v1768
        %v1835 = vmin.f32 %v1162, %v1770
        %v1836 = vmin.f32 %v1165, %v1772
        %1845 = vrot.lane.b32.xlu0 %v1829, 124
        %v1846 = vpop.permute.xlu0 %1845
        %1847 = vrot.lane.b32.xlu0 %v1830, 124
        %v1848 = vpop.permute.xlu0 %1847
        %1849 = vrot.lane.b32.xlu0 %v1831, 124
        %v1850 = vpop.permute.xlu0 %1849
        %1851 = vrot.lane.b32.xlu0 %v1832, 124
        %v1852 = vpop.permute.xlu0 %1851
        %1853 = vrot.lane.b32.xlu0 %v1833, 124
        %v1854 = vpop.permute.xlu0 %1853
        %1855 = vrot.lane.b32.xlu0 %v1834, 124
        %v1856 = vpop.permute.xlu0 %1855
        %1857 = vrot.lane.b32.xlu0 %v1835, 124
        %v1858 = vpop.permute.xlu0 %1857
        %1859 = vrot.lane.b32.xlu0 %v1836, 124
        %v1860 = vpop.permute.xlu0 %1859
        %v1869 = vmin.f32 %v1829, %v1846
        %v1870 = vmin.f32 %v1830, %v1848
        %v1871 = vmin.f32 %v1831, %v1850
        %v1872 = vmin.f32 %v1832, %v1852
        %v1873 = vmin.f32 %v1833, %v1854
        %v1874 = vmin.f32 %v1834, %v1856
        %v1875 = vmin.f32 %v1835, %v1858
        %v1876 = vmin.f32 %v1836, %v1860
        %v1877 = vld [vmem:[%s331] sm:$0xff]
        %v1878 = vld [vmem:[%s331 + $0x8] sm:$0xff]
        %v1879 = vld [vmem:[%s331 + $0x10] sm:$0xff]
        %v1880 = vld [vmem:[%s331 + $0x18] sm:$0xff]
        %v1881 = vld [vmem:[%s331 + $0x20] sm:$0xff]
        %v1882 = vld [vmem:[%s331 + $0x28] sm:$0xff]
        %v1883 = vld [vmem:[%s331 + $0x30] sm:$0xff]
        %v1884 = vld [vmem:[%s331 + $0x38] sm:$0xff]
        %vm1885 = vcmask 818176
        %v1886 = vsel %vm1885, %v1877, -inf
        %1887 = vmax.xlane.f32.xlu0 %v1886
        %v1888 = vpop.xlane.xlu0 %1887
        %v1889 = vsel %vm1885, %v1878, -inf
        %1890 = vmax.xlane.f32.xlu0 %v1889
        %v1891 = vpop.xlane.xlu0 %1890
        %v1892 = vsel %vm1885, %v1879, -inf
        %1893 = vmax.xlane.f32.xlu0 %v1892
        %v1894 = vpop.xlane.xlu0 %1893
        %v1895 = vsel %vm1885, %v1880, -inf
        %1896 = vmax.xlane.f32.xlu0 %v1895
        %v1897 = vpop.xlane.xlu0 %1896
        %v1898 = vsel %vm1885, %v1881, -inf
        %1899 = vmax.xlane.f32.xlu0 %v1898
        %v1900 = vpop.xlane.xlu0 %1899
        %v1901 = vsel %vm1885, %v1882, -inf
        %1902 = vmax.xlane.f32.xlu0 %v1901
        %v1903 = vpop.xlane.xlu0 %1902
        %v1904 = vsel %vm1885, %v1883, -inf
        %1905 = vmax.xlane.f32.xlu0 %v1904
        %v1906 = vpop.xlane.xlu0 %1905
        %v1907 = vsel %vm1885, %v1884, -inf
        %1908 = vmax.xlane.f32.xlu0 %v1907
        %v1909 = vpop.xlane.xlu0 %1908
        %v1910 = vsel %vm1885, %v1877, inf
        %1911 = vmin.xlane.f32.xlu0 %v1910
        %v1912 = vpop.xlane.xlu0 %1911
        %v1913 = vsel %vm1885, %v1878, inf
        %1914 = vmin.xlane.f32.xlu0 %v1913
        %v1915 = vpop.xlane.xlu0 %1914
        %v1916 = vsel %vm1885, %v1879, inf
        %1917 = vmin.xlane.f32.xlu0 %v1916
        %v1918 = vpop.xlane.xlu0 %1917
        %v1919 = vsel %vm1885, %v1880, inf
        %1920 = vmin.xlane.f32.xlu0 %v1919
        %v1921 = vpop.xlane.xlu0 %1920
        %v1922 = vsel %vm1885, %v1881, inf
        %1923 = vmin.xlane.f32.xlu0 %v1922
        %v1924 = vpop.xlane.xlu0 %1923
        %v1925 = vsel %vm1885, %v1882, inf
        %1926 = vmin.xlane.f32.xlu0 %v1925
        %v1927 = vpop.xlane.xlu0 %1926
        %v1928 = vsel %vm1885, %v1883, inf
        %1929 = vmin.xlane.f32.xlu0 %v1928
        %v1930 = vpop.xlane.xlu0 %1929
        %v1931 = vsel %vm1885, %v1884, inf
        %1932 = vmin.xlane.f32.xlu0 %v1931
        %v1933 = vpop.xlane.xlu0 %1932
        %v1934 = vsel %vm1885, %v1877, 0.0
        %1935 = vadd.xlane.f32.xlu0 %v1934
        %v1936 = vpop.xlane.xlu0 %1935
        %v1937 = vsel %vm1885, %v1878, 0.0
        %1938 = vadd.xlane.f32.xlu0 %v1937
        %v1939 = vpop.xlane.xlu0 %1938
        %v1940 = vsel %vm1885, %v1879, 0.0
        %1941 = vadd.xlane.f32.xlu0 %v1940
        %v1942 = vpop.xlane.xlu0 %1941
        %v1943 = vsel %vm1885, %v1880, 0.0
        %1944 = vadd.xlane.f32.xlu0 %v1943
        %v1945 = vpop.xlane.xlu0 %1944
        %v1946 = vsel %vm1885, %v1881, 0.0
        %1947 = vadd.xlane.f32.xlu0 %v1946
        %v1948 = vpop.xlane.xlu0 %1947
        %v1949 = vsel %vm1885, %v1882, 0.0
        %1950 = vadd.xlane.f32.xlu0 %v1949
        %v1951 = vpop.xlane.xlu0 %1950
        %v1952 = vsel %vm1885, %v1883, 0.0
        %1953 = vadd.xlane.f32.xlu0 %v1952
        %v1954 = vpop.xlane.xlu0 %1953
        %v1955 = vsel %vm1885, %v1884, 0.0
        %1956 = vadd.xlane.f32.xlu0 %v1955
        %v1957 = vpop.xlane.xlu0 %1956
        %v1958 = vmul.f32 %v1936, 0.01
        %v1959 = vmul.f32 %v1939, 0.01
        %v1960 = vmul.f32 %v1942, 0.01
        %v1961 = vmul.f32 %v1945, 0.01
        %v1962 = vmul.f32 %v1948, 0.01
        %v1963 = vmul.f32 %v1951, 0.01
        %v1964 = vmul.f32 %v1954, 0.01
        %v1965 = vmul.f32 %v1957, 0.01
        %v1966 = vsub.f32 %v1877, %v1958
        %v1967 = vsub.f32 %v1878, %v1959
        %v1968 = vsub.f32 %v1879, %v1960
        %v1969 = vsub.f32 %v1880, %v1961
        %v1970 = vsub.f32 %v1881, %v1962
        %v1971 = vsub.f32 %v1882, %v1963
        %v1972 = vsub.f32 %v1883, %v1964
        %v1973 = vsub.f32 %v1884, %v1965
        %v1974 = vmul.f32 %v1966, %v1966
        %v1975 = vmul.f32 %v1967, %v1967
        %v1976 = vmul.f32 %v1968, %v1968
        %v1977 = vmul.f32 %v1969, %v1969
        %v1978 = vmul.f32 %v1970, %v1970
        %v1979 = vmul.f32 %v1971, %v1971
        %v1980 = vmul.f32 %v1972, %v1972
        %v1981 = vmul.f32 %v1973, %v1973
        %v1982 = vsel %vm1885, %v1974, 0.0
        %1983 = vadd.xlane.f32.xlu0 %v1982
        %v1984 = vpop.xlane.xlu0 %1983
        %v1985 = vsel %vm1885, %v1975, 0.0
        %1986 = vadd.xlane.f32.xlu0 %v1985
        %v1987 = vpop.xlane.xlu0 %1986
        %v1988 = vsel %vm1885, %v1976, 0.0
        %1989 = vadd.xlane.f32.xlu0 %v1988
        %v1990 = vpop.xlane.xlu0 %1989
        %v1991 = vsel %vm1885, %v1977, 0.0
        %1992 = vadd.xlane.f32.xlu0 %v1991
        %v1993 = vpop.xlane.xlu0 %1992
        %v1994 = vsel %vm1885, %v1978, 0.0
        %1995 = vadd.xlane.f32.xlu0 %v1994
        %v1996 = vpop.xlane.xlu0 %1995
        %v1997 = vsel %vm1885, %v1979, 0.0
        %1998 = vadd.xlane.f32.xlu0 %v1997
        %v1999 = vpop.xlane.xlu0 %1998
        %v2000 = vsel %vm1885, %v1980, 0.0
        %2001 = vadd.xlane.f32.xlu0 %v2000
        %v2002 = vpop.xlane.xlu0 %2001
        %v2003 = vsel %vm1885, %v1981, 0.0
        %2004 = vadd.xlane.f32.xlu0 %v2003
        %v2005 = vpop.xlane.xlu0 %2004
        %v2006 = vmul.f32 %v1984, 0.01010101
        %v2007 = vmul.f32 %v1987, 0.01010101
        %v2008 = vmul.f32 %v1990, 0.01010101
        %v2009 = vmul.f32 %v1993, 0.01010101
        %v2010 = vmul.f32 %v1996, 0.01010101
        %v2011 = vmul.f32 %v1999, 0.01010101
        %v2012 = vmul.f32 %v2002, 0.01010101
        %v2013 = vmul.f32 %v2005, 0.01010101
        %2022 = vrot.lane.b32.xlu0 %v1741, 16
        %v2023 = vpop.permute.xlu0 %2022
        %2024 = vrot.lane.b32.xlu0 %v1742, 16
        %v2025 = vpop.permute.xlu0 %2024
        %2026 = vrot.lane.b32.xlu0 %v1743, 16
        %v2027 = vpop.permute.xlu0 %2026
        %2028 = vrot.lane.b32.xlu0 %v1744, 16
        %v2029 = vpop.permute.xlu0 %2028
        %2030 = vrot.lane.b32.xlu0 %v1745, 16
        %v2031 = vpop.permute.xlu0 %2030
        %2032 = vrot.lane.b32.xlu0 %v1746, 16
        %v2033 = vpop.permute.xlu0 %2032
        %2034 = vrot.lane.b32.xlu0 %v1747, 16
        %v2035 = vpop.permute.xlu0 %2034
        %2036 = vrot.lane.b32.xlu0 %v1748, 16
        %v2037 = vpop.permute.xlu0 %2036
        %2054 = vrot.lane.b32.xlu0 %v1821, 32
        %v2055 = vpop.permute.xlu0 %2054
        %2056 = vrot.lane.b32.xlu0 %v1822, 32
        %v2057 = vpop.permute.xlu0 %2056
        %2058 = vrot.lane.b32.xlu0 %v1823, 32
        %v2059 = vpop.permute.xlu0 %2058
        %2060 = vrot.lane.b32.xlu0 %v1824, 32
        %v2061 = vpop.permute.xlu0 %2060
        %2062 = vrot.lane.b32.xlu0 %v1825, 32
        %v2063 = vpop.permute.xlu0 %2062
        %2064 = vrot.lane.b32.xlu0 %v1826, 32
        %v2065 = vpop.permute.xlu0 %2064
        %2066 = vrot.lane.b32.xlu0 %v1827, 32
        %v2067 = vpop.permute.xlu0 %2066
        %2068 = vrot.lane.b32.xlu0 %v1828, 32
        %v2069 = vpop.permute.xlu0 %2068
        %2086 = vrot.lane.b32.xlu0 %v1869, 36
        %v2087 = vpop.permute.xlu0 %2086
        %2088 = vrot.lane.b32.xlu0 %v1870, 36
        %v2089 = vpop.permute.xlu0 %2088
        %2090 = vrot.lane.b32.xlu0 %v1871, 36
        %v2091 = vpop.permute.xlu0 %2090
        %2092 = vrot.lane.b32.xlu0 %v1872, 36
        %v2093 = vpop.permute.xlu0 %2092
        %2094 = vrot.lane.b32.xlu0 %v1873, 36
        %v2095 = vpop.permute.xlu0 %2094
        %2096 = vrot.lane.b32.xlu0 %v1874, 36
        %v2097 = vpop.permute.xlu0 %2096
        %2098 = vrot.lane.b32.xlu0 %v1875, 36
        %v2099 = vpop.permute.xlu0 %2098
        %2100 = vrot.lane.b32.xlu0 %v1876, 36
        %v2101 = vpop.permute.xlu0 %2100
        %2110 = vrot.lane.b32.xlu0 %v1138, 24
        %v2111 = vpop.permute.xlu0 %2110
        %2112 = vrot.lane.b32.xlu0 %v1141, 24
        %v2113 = vpop.permute.xlu0 %2112
        %2114 = vrot.lane.b32.xlu0 %v1146, 24
        %v2115 = vpop.permute.xlu0 %2114
        %2116 = vrot.lane.b32.xlu0 %v1149, 24
        %v2117 = vpop.permute.xlu0 %2116
        %2118 = vrot.lane.b32.xlu0 %v1154, 24
        %v2119 = vpop.permute.xlu0 %2118
        %2120 = vrot.lane.b32.xlu0 %v1157, 24
        %v2121 = vpop.permute.xlu0 %2120
        %2122 = vrot.lane.b32.xlu0 %v1162, 24
        %v2123 = vpop.permute.xlu0 %2122
        %2124 = vrot.lane.b32.xlu0 %v1165, 24
        %v2125 = vpop.permute.xlu0 %2124
        %2142 = vrot.lane.b32.xlu0 %v1485, 60
        %v2143 = vpop.permute.xlu0 %2142
        %2144 = vrot.lane.b32.xlu0 %v1486, 60
        %v2145 = vpop.permute.xlu0 %2144
        %2146 = vrot.lane.b32.xlu0 %v1487, 60
        %v2147 = vpop.permute.xlu0 %2146
        %2148 = vrot.lane.b32.xlu0 %v1488, 60
        %v2149 = vpop.permute.xlu0 %2148
        %2150 = vrot.lane.b32.xlu0 %v1489, 60
        %v2151 = vpop.permute.xlu0 %2150
        %2152 = vrot.lane.b32.xlu0 %v1490, 60
        %v2153 = vpop.permute.xlu0 %2152
        %2154 = vrot.lane.b32.xlu0 %v1491, 60
        %v2155 = vpop.permute.xlu0 %2154
        %2156 = vrot.lane.b32.xlu0 %v1492, 60
        %v2157 = vpop.permute.xlu0 %2156
        %v2166 = vsel %vm1226, %v1613, %v2023
        %v2167 = vsel %vm1226, %v1614, %v2025
        %v2168 = vsel %vm1226, %v1615, %v2027
        %v2169 = vsel %vm1226, %v1616, %v2029
        %v2170 = vsel %vm1226, %v1617, %v2031
        %v2171 = vsel %vm1226, %v1618, %v2033
        %v2172 = vsel %vm1226, %v1619, %v2035
        %v2173 = vsel %vm1226, %v1620, %v2037
        %vm2174 = vcmask 261120
        %v2175 = vsel %vm2174, %v2166, %v2055
        %v2176 = vsel %vm2174, %v2167, %v2057
        %v2177 = vsel %vm2174, %v2168, %v2059
        %v2178 = vsel %vm2174, %v2169, %v2061
        %v2179 = vsel %vm2174, %v2170, %v2063
        %v2180 = vsel %vm2174, %v2171, %v2065
        %v2181 = vsel %vm2174, %v2172, %v2067
        %v2182 = vsel %vm2174, %v2173, %v2069
        %vm2183 = vcmask 293888
        %v2184 = vsel %vm2183, %v2175, %v2087
        %v2185 = vsel %vm2183, %v2176, %v2089
        %v2186 = vsel %vm2183, %v2177, %v2091
        %v2187 = vsel %vm2183, %v2178, %v2093
        %v2188 = vsel %vm2183, %v2179, %v2095
        %v2189 = vsel %vm2183, %v2180, %v2097
        %v2190 = vsel %vm2183, %v2181, %v2099
        %v2191 = vsel %vm2183, %v2182, %v2101
        %vm2192 = vcmask 326656
        %v2193 = vsel %vm2192, %v2184, %v2111
        %v2194 = vsel %vm2192, %v2185, %v2113
        %v2195 = vsel %vm2192, %v2186, %v2115
        %v2196 = vsel %vm2192, %v2187, %v2117
        %v2197 = vsel %vm2192, %v2188, %v2119
        %v2198 = vsel %vm2192, %v2189, %v2121
        %v2199 = vsel %vm2192, %v2190, %v2123
        %v2200 = vsel %vm2192, %v2191, %v2125
        %vm2201 = vcmask 490496
        %v2202 = vsel %vm2201, %v2193, %v2143
        %v2203 = vsel %vm2201, %v2194, %v2145
        %v2204 = vsel %vm2201, %v2195, %v2147
        %v2205 = vsel %vm2201, %v2196, %v2149
        %v2206 = vsel %vm2201, %v2197, %v2151
        %v2207 = vsel %vm2201, %v2198, %v2153
        %v2208 = vsel %vm2201, %v2199, %v2155
        %v2209 = vsel %vm2201, %v2200, %v2157
        %vm2210 = vcmask 654336
        %v2211 = vsel %vm2210, %v2202, %v1888
        %v2212 = vsel %vm2210, %v2203, %v1891
        %v2213 = vsel %vm2210, %v2204, %v1894
        %v2214 = vsel %vm2210, %v2205, %v1897
        %v2215 = vsel %vm2210, %v2206, %v1900
        %v2216 = vsel %vm2210, %v2207, %v1903
        %v2217 = vsel %vm2210, %v2208, %v1906
        %v2218 = vsel %vm2210, %v2209, %v1909
        %vm2219 = vcmask 662528
        %v2220 = vsel %vm2219, %v2211, %v1912
        %v2221 = vsel %vm2219, %v2212, %v1915
        %v2222 = vsel %vm2219, %v2213, %v1918
        %v2223 = vsel %vm2219, %v2214, %v1921
        %v2224 = vsel %vm2219, %v2215, %v1924
        %v2225 = vsel %vm2219, %v2216, %v1927
        %v2226 = vsel %vm2219, %v2217, %v1930
        %v2227 = vsel %vm2219, %v2218, %v1933
        %vm2228 = vcmask 670720
        %v2229 = vsel %vm2228, %v2220, %v1958
        %v2230 = vsel %vm2228, %v2221, %v1959
        %v2231 = vsel %vm2228, %v2222, %v1960
        %v2232 = vsel %vm2228, %v2223, %v1961
        %v2233 = vsel %vm2228, %v2224, %v1962
        %v2234 = vsel %vm2228, %v2225, %v1963
        %v2235 = vsel %vm2228, %v2226, %v1964
        %v2236 = vsel %vm2228, %v2227, %v1965
        %vm2237 = vcmask 678912
        %v2238 = vsel %vm2237, %v2229, %v2006
        %v2239 = vsel %vm2237, %v2230, %v2007
        %v2240 = vsel %vm2237, %v2231, %v2008
        %v2241 = vsel %vm2237, %v2232, %v2009
        %v2242 = vsel %vm2237, %v2233, %v2010
        %v2243 = vsel %vm2237, %v2234, %v2011
        %v2244 = vsel %vm2237, %v2235, %v2012
        %v2245 = vsel %vm2237, %v2236, %v2013
        %s2246 = smul.u32 %s26, 88
        %s2247 = scalar_lea.vmem %s5, %s2246
        %v2248 = vld [vmem:[%s2247] sm:$0xff]
        %v2249 = vld [vmem:[%s2247 + $0x8] sm:$0xff]
        %v2250 = vld [vmem:[%s2247 + $0x10] sm:$0xff]
        %v2251 = vld [vmem:[%s2247 + $0x18] sm:$0xff]
        %v2252 = vld [vmem:[%s2247 + $0x20] sm:$0xff]
        %v2253 = vld [vmem:[%s2247 + $0x28] sm:$0xff]
        %v2254 = vld [vmem:[%s2247 + $0x30] sm:$0xff]
        %v2255 = vld [vmem:[%s2247 + $0x38] sm:$0xff]
        %v2256 = vld [vmem:[%s2247 + $0x40] sm:$0xff]
        %v2257 = vld [vmem:[%s2247 + $0x48] sm:$0xff]
        %v2258 = vld [vmem:[%s2247 + $0x50] sm:$0xf]
        %v2260 = vsel %vm869, %v2238, 0
        %v2263 = vsel %vm869, %v2239, 0
        %v2266 = vsel %vm869, %v2240, 0
        %v2269 = vsel %vm869, %v2241, 0
        %v2272 = vsel %vm869, %v2242, 0
        %v2275 = vsel %vm869, %v2243, 0
        %v2278 = vsel %vm869, %v2244, 0
        %v2281 = vsel %vm869, %v2245, 0
        %vm2283 = vcmask 1043456
        %v2285 = vsel %vm2283, %v2258, 0
        %2287 = vmatprep.subr.mxu0 0.0
        %2288 = vmatpush1.msra.mxu0 0.0
        %2289 = vmatprep.subr.mxu0 0.0
        %2290 = vmatpush1.msra.mxu0 0.0
        %2291 = vmatprep.subr.mxu0 0.0
        %2292 = vmatpush1.msra.mxu0 0.0
        %2293 = vmatprep.subr.mxu0 0.0
        %2294 = vmatpush1.msra.mxu0 0.0
        %2295 = vmatprep.subr.mxu0 0.0
        %2296 = vmatpush1.msra.mxu0 0.0
        %2297 = vmatprep.subr.mxu0 0.0
        %2298 = vmatpush1.msra.mxu0 %v2285
        %2299 = vmatprep.subr.mxu0 0.0
        %2300 = vmatpush1.msra.mxu0 %v2257
        %2301 = vmatprep.subr.mxu0 0.0
        %2302 = vmatpush1.msra.mxu0 %v2256
        %2303 = vmatprep.subr.mxu0 0.0
        %2304 = vmatpush1.msra.mxu0 %v2255
        %2305 = vmatprep.subr.mxu0 0.0
        %2306 = vmatpush1.msra.mxu0 %v2254
        %2307 = vmatprep.subr.mxu0 0.0
        %2308 = vmatpush1.msra.mxu0 %v2253
        %2309 = vmatprep.subr.mxu0 0.0
        %2310 = vmatpush1.msra.mxu0 %v2252
        %2311 = vmatprep.subr.mxu0 0.0
        %2312 = vmatpush1.msra.mxu0 %v2251
        %2313 = vmatprep.subr.mxu0 0.0
        %2314 = vmatpush1.msra.mxu0 %v2250
        %2315 = vmatprep.subr.mxu0 0.0
        %2316 = vmatpush1.msra.mxu0 %v2249
        %2317 = vmatprep.subr.mxu0 0.0
        %2318 = vmatpush1.msra.mxu0 %v2248
        %2319 = vmatprep.subr.mxu0 0.0
        %2320 = vmatpush2.msra.mxu0 0.0
        %2321 = vmatprep.subr.mxu0 0.0
        %2322 = vmatpush2.msra.mxu0 0.0
        %2323 = vmatprep.subr.mxu0 0.0
        %2324 = vmatpush2.msra.mxu0 0.0
        %2325 = vmatprep.subr.mxu0 0.0
        %2326 = vmatpush2.msra.mxu0 0.0
        %2327 = vmatprep.subr.mxu0 0.0
        %2328 = vmatpush2.msra.mxu0 0.0
        %2329 = vmatprep.subr.mxu0 0.0
        %2330 = vmatpush2.msra.mxu0 0.0
        %2331 = vmatprep.subr.mxu0 0.0
        %2332 = vmatpush2.msra.mxu0 0.0
        %2333 = vmatprep.subr.mxu0 0.0
        %2334 = vmatpush2.msra.mxu0 0.0
        %2335 = vmatprep.subr.mxu0 0.0
        %2336 = vmatpush2.msra.mxu0 0.0
        %2337 = vmatprep.subr.mxu0 0.0
        %2338 = vmatpush2.msra.mxu0 0.0
        %2339 = vmatprep.subr.mxu0 0.0
        %2340 = vmatpush2.msra.mxu0 0.0
        %2341 = vmatprep.subr.mxu0 0.0
        %2342 = vmatpush2.msra.mxu0 0.0
        %2343 = vmatprep.subr.mxu0 0.0
        %2344 = vmatpush2.msra.mxu0 0.0
        %2345 = vmatprep.subr.mxu0 0.0
        %2346 = vmatpush2.msra.mxu0 0.0
        %2347 = vmatprep.subr.mxu0 0.0
        %2348 = vmatpush2.msra.mxu0 0.0
        %2349 = vmatprep.subr.mxu0 0.0
        %2350 = vmatpush2.msra.mxu0 0.0
        %2351 = vmatprep.mubr.f32.mxu0 0.0
        %2352 = vmatmul.mubr.f32.gmra.mxu0 %v2260
        %v2353 = vpop.f32.mrf.mxu0
        %v2354 = vadd.f32 0.0, %v2353
        %v2355 = vpop.f32.mrf.mxu0
        %2356 = vmatprep.mubr.f32.mxu0 0.0
        %2357 = vmatmul.mubr.f32.gmra.mxu0 %v2263
        %v2358 = vpop.f32.mrf.mxu0
        %v2359 = vadd.f32 0.0, %v2358
        %v2360 = vpop.f32.mrf.mxu0
        %2361 = vmatprep.mubr.f32.mxu0 0.0
        %2362 = vmatmul.mubr.f32.gmra.mxu0 %v2266
        %v2363 = vpop.f32.mrf.mxu0
        %v2364 = vadd.f32 0.0, %v2363
        %v2365 = vpop.f32.mrf.mxu0
        %2366 = vmatprep.mubr.f32.mxu0 0.0
        %2367 = vmatmul.mubr.f32.gmra.mxu0 %v2269
        %v2368 = vpop.f32.mrf.mxu0
        %v2369 = vadd.f32 0.0, %v2368
        %v2370 = vpop.f32.mrf.mxu0
        %2371 = vmatprep.mubr.f32.mxu0 0.0
        %2372 = vmatmul.mubr.f32.gmra.mxu0 %v2272
        %v2373 = vpop.f32.mrf.mxu0
        %v2374 = vadd.f32 0.0, %v2373
        %v2375 = vpop.f32.mrf.mxu0
        %2376 = vmatprep.mubr.f32.mxu0 0.0
        %2377 = vmatmul.mubr.f32.gmra.mxu0 %v2275
        %v2378 = vpop.f32.mrf.mxu0
        %v2379 = vadd.f32 0.0, %v2378
        %v2380 = vpop.f32.mrf.mxu0
        %2381 = vmatprep.mubr.f32.mxu0 0.0
        %2382 = vmatmul.mubr.f32.gmra.mxu0 %v2278
        %v2383 = vpop.f32.mrf.mxu0
        %v2384 = vadd.f32 0.0, %v2383
        %v2385 = vpop.f32.mrf.mxu0
        %2386 = vmatprep.mubr.f32.mxu0 0.0
        %2387 = vmatmul.mubr.f32.gmra.mxu0 %v2281
        %v2388 = vpop.f32.mrf.mxu0
        %v2389 = vadd.f32 0.0, %v2388
        %v2390 = vpop.f32.mrf.mxu0
        %2391 = vdwg.mxu0
        %p2392 = scmp.eq.s32.totalorder %s26, 0
        // Predicated region
        $region49: #{cspp_sid_forward.1} parent=47 // pred_check
          %p2393 = pneg %p2392
        $region50: #{cspp_sid_forward.1} parent=47 // pred_check_branch
          %2395 = sbr.rel (%p2393) target = $region52
        $region51: #{cspp_sid_forward.1} parent=47 // pred_region
          %v2396 = vld [vmem:[%s6] sm:$0x1]
          %v2398 = vlaneseq
          %v2399 = vshrl.u32 %v2398, 7
          %v2400 = vsub.s32 0, %v2399
          %v2401 = vrot.slane %v2396, %v2400
          %v2403 = vadd.f32 %v2401, %v2354
          %v2404 = vadd.f32 %v2401, %v2359
          %v2405 = vadd.f32 %v2401, %v2364
          %v2406 = vadd.f32 %v2401, %v2369
          %v2407 = vadd.f32 %v2401, %v2374
          %v2408 = vadd.f32 %v2401, %v2379
          %v2409 = vadd.f32 %v2401, %v2384
          %v2410 = vadd.f32 %v2401, %v2389
          %2411 = vst [vmem:[%s322] sm:$0xff] %v2403
          %2412 = vst [vmem:[%s322 + $0x8] sm:$0xff] %v2404
          %2413 = vst [vmem:[%s322 + $0x10] sm:$0xff] %v2405
          %2414 = vst [vmem:[%s322 + $0x18] sm:$0xff] %v2406
          %2415 = vst [vmem:[%s322 + $0x20] sm:$0xff] %v2407
          %2416 = vst [vmem:[%s322 + $0x28] sm:$0xff] %v2408
          %2417 = vst [vmem:[%s322 + $0x30] sm:$0xff] %v2409
          %2418 = vst [vmem:[%s322 + $0x38] sm:$0xff] %v2410
        $region52: #{cspp_sid_forward.1} parent=47 // pred_fallthru
          _
        %p2419 = scmp.gt.s32.totalorder %s26, 0
        // Predicated region
        $region53: #{cspp_sid_forward.1} parent=47 // pred_check
          %p2420 = pneg %p2419
        $region54: #{cspp_sid_forward.1} parent=47 // pred_check_branch
          %2422 = sbr.rel (%p2420) target = $region56
        $region55: #{cspp_sid_forward.1} parent=47 // pred_region
          %v2423 = vld [vmem:[%s322] sm:$0xff]
          %v2424 = vld [vmem:[%s322 + $0x8] sm:$0xff]
          %v2425 = vld [vmem:[%s322 + $0x10] sm:$0xff]
          %v2426 = vld [vmem:[%s322 + $0x18] sm:$0xff]
          %v2427 = vld [vmem:[%s322 + $0x20] sm:$0xff]
          %v2428 = vld [vmem:[%s322 + $0x28] sm:$0xff]
          %v2429 = vld [vmem:[%s322 + $0x30] sm:$0xff]
          %v2430 = vld [vmem:[%s322 + $0x38] sm:$0xff]
          %v2431 = vadd.f32 %v2423, %v2354
          %v2432 = vadd.f32 %v2424, %v2359
          %v2433 = vadd.f32 %v2425, %v2364
          %v2434 = vadd.f32 %v2426, %v2369
          %v2435 = vadd.f32 %v2427, %v2374
          %v2436 = vadd.f32 %v2428, %v2379
          %v2437 = vadd.f32 %v2429, %v2384
          %v2438 = vadd.f32 %v2430, %v2389
          %2439 = vst [vmem:[%s322] sm:$0xff] %v2431
          %2440 = vst [vmem:[%s322 + $0x8] sm:$0xff] %v2432
          %2441 = vst [vmem:[%s322 + $0x10] sm:$0xff] %v2433
          %2442 = vst [vmem:[%s322 + $0x18] sm:$0xff] %v2434
          %2443 = vst [vmem:[%s322 + $0x20] sm:$0xff] %v2435
          %2444 = vst [vmem:[%s322 + $0x28] sm:$0xff] %v2436
          %2445 = vst [vmem:[%s322 + $0x30] sm:$0xff] %v2437
          %2446 = vst [vmem:[%s322 + $0x38] sm:$0xff] %v2438
        $region56: #{cspp_sid_forward.1} parent=47 // pred_fallthru
          _
        %s2447 = sand.u32 %s202, 1
        %s2448 = scalar_lea.sflag [#allocation3], %s2447
        %s2449 = sand.u32 %s202, 1
        %s2450 = smul.addr %s2449, 64
        %s2451 = scalar_lea.vmem [#allocation2], %s2450
        // Predicated region
        $region57: #{cspp_sid_forward.1} parent=47 // pred_check
          %p2452 = pneg %p212
        $region58: #{cspp_sid_forward.1} parent=47 // pred_check_branch
          %2454 = sbr.rel (%p2452) target = $region60
        $region59: #{cspp_sid_forward.1} parent=47 // pred_region
          %s2455 = smul.u32 8, %s25
          %s2457 = ssub.s32 1024, 1024
          %2458 = vsyncadd %s2448, %s2457
          %s2459 = smul.addr %s2455, 128
          %s2460 = scalar_lea.hbm %s7, %s2459
          %s2461 = sshll.u32 %s2451, 4
          %s2462 = int_to_ptr.vmem [resolvable:$true] %s2461
          %2467 = dma.vmem_to_hbm [thread:$0]  %s2462, 1024, %s2460, %s2448, 128, 128, 8
        $region60: #{cspp_sid_forward.1} parent=47 // pred_fallthru
          _
      $region48: #{cspp_sid_forward.1} parent=5 // pred_fallthru
        _
      %p2468 = scmp.le.s32.totalorder 2, %s16
      // Predicated region
      $region61: #{cspp_sid_forward.1} parent=5 // pred_check
        %p2469 = pneg %p2468
      $region62: #{cspp_sid_forward.1} parent=5 // pred_check_branch
        %2471 = sbr.rel (%p2469) target = $region64
      $region63: #{cspp_sid_forward.1} parent=5 // pred_region
        %s2472 = ssub.s32 %s16, 2
        // Predicated region
        $region65: #{cspp_sid_forward.1} parent=63 // pred_check
          %p2473 = pneg %p218
        $region66: #{cspp_sid_forward.1} parent=63 // pred_check_branch
          %2475 = sbr.rel (%p2473) target = $region68
        $region67: #{cspp_sid_forward.1} parent=63 // pred_region
          %s2476 = sand.u32 %s203, 1
          %s2477 = scalar_lea.sflag [#allocation3], %s2476
          %s2478 = sand.u32 %s203, 1
          %s2479 = smul.addr %s2478, 64
          %s2480 = scalar_lea.vmem [#allocation2], %s2479
          %2481 = dma.done %s2477, 1024
        $region68: #{cspp_sid_forward.1} parent=63 // pred_fallthru
          _
      $region64: #{cspp_sid_forward.1} parent=5 // pred_fallthru
        _
    $region6: #{cspp_sid_forward.1} parent=1 // loop_footer
      %s20 = sadd.s32 1, %s16
    $region7: #{cspp_sid_forward.1} parent=1 // loop_footer_branch
      %15 = sbr.rel target = $region3
    $region8: #{cspp_sid_forward.1} parent=1 // loop_exit
      _
    %2482 = vsyncpa [#allocation3], 1
    %s2483 = scalar_lea.sflag [#allocation3], 1
    %2484 = vsyncpa %s2483, 1

</llo_original>
